<compile_context>
chip_gen: v5e
topology: v5e:2x2
jax: 0.10.0
libtpu: 0.0.40
codegen_flags: <defaults>
</compile_context>

<pallas_src>
import functools
import math

import jax
import jax.numpy as jnp
from jax.experimental import pallas as pl
from jax.experimental.pallas import tpu as pltpu


_INV_SQRT2 = 1.0 / math.sqrt(2.0)
# Conservative per-call VMEM budget: fits under the default scoped limit on
# v5e (16 MiB) and leaves ample headroom on v6e/v7x.
_VMEM_BUDGET_BYTES = 12 * 1024 * 1024


def _gelu(x, approximate=False):
    if approximate:
        return jax.nn.gelu(x, approximate=True)
    return 0.5 * x * (1.0 + jax.lax.erf(x * _INV_SQRT2))


def _layernorm(h, gamma, beta, eps):
    mean = jnp.mean(h, axis=-1, keepdims=True)
    centered = h - mean
    var = jnp.mean(centered * centered, axis=-1, keepdims=True)
    return centered * jax.lax.rsqrt(var + eps) * gamma + beta


def _round_up(x, m):
    return ((x + m - 1) // m) * m


def _default_tile_m(M, d_in, d_out, in_itemsize):
    """Batch-tile rows: multiple of 8 sublanes, >=2 grid steps, VMEM-bounded."""
    if M <= 8:
        return M
    # Rough per-row VMEM: double-buffered x tile + double-buffered out tile + f32 acc.
    per_row = 2 * d_in * in_itemsize + 2 * d_out * 4 + d_out * 4
    tm = max(8, _VMEM_BUDGET_BYTES // max(per_row, 1))
    tm = min(tm, 512)                              # diminishing returns beyond this
    tm = min(tm, _round_up(max(M // 2, 1), 8))     # >=2 steps: pipelining + megacore
    return max(8, (tm // 8) * 8)


def _default_tile_k(d_in):
    """Reduction tile: stream the weight in 128/256-row slabs when divisible."""
    if d_in % 256 == 0 and d_in >= 512:
        return 256
    if d_in % 128 == 0 and d_in >= 256:
        return 128
    return d_in


# ---------------------------------------------------------------------------
# Per-layer kernel: grid (M tiles, K tiles), f32 accumulator, fused epilogue.
# ---------------------------------------------------------------------------
def _mlp_layer_kernel(x_ref, w_ref, b_ref, gamma_ref, beta_ref, o_ref, acc_ref,
                      *, eps, approximate_gelu):
    k = pl.program_id(1)

    @pl.when(k == 0)
    def _init():
        acc_ref[...] = jnp.zeros_like(acc_ref)

    # bf16 (or f32) MXU operands, f32 accumulation on the MXU.
    acc_ref[...] += jnp.dot(x_ref[...].astype(w_ref.dtype), w_ref[...],
                            preferred_element_type=jnp.float32)

    @pl.when(k == pl.num_programs(1) - 1)
    def _finalize():
        h = acc_ref[...] + b_ref[...].astype(jnp.float32)
        h = _gelu(h, approximate_gelu)
        # Dropout: identity in eval mode.
        # TODO(synk): training-mode dropout (stochastic masking) not implemented.
        h = _layernorm(h, gamma_ref[...].astype(jnp.float32),
                       beta_ref[...].astype(jnp.float32), eps)
        o_ref[...] = h.astype(o_ref.dtype)


def mlp_layer(x, w, b, gamma, beta, *, eps=1e-5, tile_m=None, tile_k=None,
              out_dtype=None, approximate_gelu=False):
    """One fused Linear + GELU + (eval) Dropout + LayerNorm layer."""
    M, D_in = x.shape
    D_out = w.shape[1]
    out_dtype = x.dtype if out_dtype is None else out_dtype
    if tile_m is None:
        tile_m = _default_tile_m(M, D_in, D_out, x.dtype.itemsize)
    if tile_k is None:
        tile_k = _default_tile_k(D_in)
    assert D_in % tile_k == 0, "tile_k must divide D_in"
    # TODO(synk): for very large D_out, also tile N and split LayerNorm into a
    #             second lightweight row-stats pass instead of full-row residency.

    grid = (pl.cdiv(M, tile_m), D_in // tile_k)
    kernel = functools.partial(_mlp_layer_kernel, eps=eps,
                               approximate_gelu=approximate_gelu)
    return pl.pallas_call(
        kernel,
        out_shape=jax.ShapeDtypeStruct((M, D_out), out_dtype),
        grid_spec=pltpu.PrefetchScalarGridSpec(
            num_scalar_prefetch=0,
            grid=grid,
            in_specs=[
                pl.BlockSpec((tile_m, tile_k), lambda i, k: (i, k)),
                pl.BlockSpec((tile_k, D_out), lambda i, k: (k, 0)),
                pl.BlockSpec((1, D_out), lambda i, k: (0, 0)),
                pl.BlockSpec((1, D_out), lambda i, k: (0, 0)),
                pl.BlockSpec((1, D_out), lambda i, k: (0, 0)),
            ],
            out_specs=pl.BlockSpec((tile_m, D_out), lambda i, k: (i, 0)),
            scratch_shapes=[pltpu.VMEM((tile_m, D_out), jnp.float32)],
        ),
        compiler_params=pltpu.CompilerParams(
            dimension_semantics=("parallel", "arbitrary"),
        ),
    )(x, w, b, gamma, beta)


# ---------------------------------------------------------------------------
# Whole-stack fused kernel: one pallas_call, grid over batch tiles only.
# ---------------------------------------------------------------------------
def _mlp_fused_kernel(*refs, num_layers, eps, approximate_gelu):
    x_ref, o_ref = refs[0], refs[-1]
    layer_refs = refs[1:-1]
    h = x_ref[...].astype(jnp.float32)
    for l in range(num_layers):
        w_ref, b_ref, gamma_ref, beta_ref = layer_refs[4 * l:4 * l + 4]
        h = jnp.dot(h.astype(w_ref.dtype), w_ref[...],
                    preferred_element_type=jnp.float32)
        h = h + b_ref[...].astype(jnp.float32)
        h = _gelu(h, approximate_gelu)
        # Dropout: identity in eval mode.
        h = _layernorm(h, gamma_ref[...].astype(jnp.float32),
                       beta_ref[...].astype(jnp.float32), eps)
    o_ref[...] = h.astype(o_ref.dtype)


def mlp_forward_fused(x, params, *, eps=1e-5, tile_m=None, approximate_gelu=False):
    M, D_in = x.shape
    D_out = params[-1][0].shape[1]
    widest = max(p[0].shape[1] for p in params)
    if tile_m is None:
        tile_m = _default_tile_m(M, D_in, widest, x.dtype.itemsize)

    in_specs = [pl.BlockSpec((tile_m, D_in), lambda i: (i, 0))]
    operands = [x]
    for (w, b, gamma, beta) in params:
        din, dout = w.shape
        # Constant-index blocks: weights/vectors stay resident across the grid.
        # TODO(synk): pipeline_mode=pl.Buffered(1) on these constant blocks would
        #             drop the redundant second buffer and free VMEM for bigger tiles.
        in_specs.append(pl.BlockSpec((din, dout), lambda i: (0, 0)))
        in_specs.append(pl.BlockSpec((1, dout), lambda i: (0, 0)))
        in_specs.append(pl.BlockSpec((1, dout), lambda i: (0, 0)))
        in_specs.append(pl.BlockSpec((1, dout), lambda i: (0, 0)))
        operands += [w, b, gamma, beta]

    kernel = functools.partial(_mlp_fused_kernel, num_layers=len(params),
                               eps=eps, approximate_gelu=approximate_gelu)
    return pl.pallas_call(
        kernel,
        out_shape=jax.ShapeDtypeStruct((M, D_out), x.dtype),
        grid_spec=pltpu.PrefetchScalarGridSpec(
            num_scalar_prefetch=0,
            grid=(pl.cdiv(M, tile_m),),
            in_specs=in_specs,
            out_specs=pl.BlockSpec((tile_m, D_out), lambda i: (i, 0)),
        ),
        compiler_params=pltpu.CompilerParams(
            dimension_semantics=("parallel",),
        ),
    )(*operands)


def _fused_vmem_estimate(tile_m, params, x_itemsize):
    total = 0
    for (w, b, gamma, beta) in params:
        total += 2 * w.size * w.dtype.itemsize                # default double-buffered
        total += 2 * 4 * (b.size + gamma.size + beta.size)
    d_in = params[0][0].shape[0]
    d_out = params[-1][0].shape[1]
    widest = max(p[0].shape[1] for p in params)
    total += 2 * tile_m * d_in * x_itemsize                   # x tile (double-buffered)
    total += 2 * tile_m * d_out * 4                           # out tile (double-buffered)
    total += 2 * tile_m * widest * 4                          # in-flight f32 activations
    return total


def mlp_forward(x, params, *, eps=1e-5, fuse=None, tile_m=None,
                approximate_gelu=False):
    """Forward pass of the (Linear -> GELU -> Dropout -> LayerNorm) x N stack."""
    if fuse is None:
        M, D_in = x.shape
        widest = max(p[0].shape[1] for p in params)
        tm = tile_m or _default_tile_m(M, D_in, widest, x.dtype.itemsize)
        fuse = _fused_vmem_estimate(tm, params, x.dtype.itemsize) <= _VMEM_BUDGET_BYTES
    if fuse:
        return mlp_forward_fused(x, params, eps=eps, tile_m=tile_m,
                                 approximate_gelu=approximate_gelu)
    out = x
    final_dtype = x.dtype
    for i, (w, b, gamma, beta) in enumerate(params):
        last = i == len(params) - 1
        # Intermediate activations carried in the matmul dtype (bf16): the next
        # layer feeds them straight to the MXU, and inter-layer HBM traffic halves.
        out = mlp_layer(out, w, b, gamma, beta, eps=eps, tile_m=tile_m,
                        out_dtype=(final_dtype if last else w.dtype),
                        approximate_gelu=approximate_gelu)
    return out


# ---------------------------------------------------------------------------
# Params / reference
# ---------------------------------------------------------------------------
def init_mlp_params(key, embedding_dim, hidden_dims, weight_dtype=jnp.bfloat16):
    """PyTorch nn.Linear-style init; weights stored [in, out] (transposed)."""
    params = []
    input_dim = embedding_dim
    for dim in hidden_dims:
        key, kw, kb = jax.random.split(key, 3)
        bound = 1.0 / math.sqrt(input_dim)
        w = jax.random.uniform(kw, (input_dim, dim), jnp.float32, -bound, bound)
        b = jax.random.uniform(kb, (1, dim), jnp.float32, -bound, bound)
        gamma = jnp.ones((1, dim), jnp.float32)   # LayerNorm weight
        beta = jnp.zeros((1, dim), jnp.float32)   # LayerNorm bias
        params.append((w.astype(weight_dtype), b, gamma, beta))
        input_dim = dim
    return params


def mlp_forward_ref(x, params, eps=1e-5, matmul_dtype=None):
    """Pure-JAX reference. matmul_dtype=jnp.bfloat16 emulates the bf16-MXU path."""
    h = x.astype(jnp.float32)
    for (w, b, gamma, beta) in params:
        if matmul_dtype is not None:
            z = jnp.dot(h.astype(matmul_dtype), w.astype(matmul_dtype),
                        preferred_element_type=jnp.float32)
        else:
            z = jnp.dot(h, w.astype(jnp.float32),
                        precision=jax.lax.Precision.HIGHEST)
        z = z + b
        z = 0.5 * z * (1.0 + jax.lax.erf(z * _INV_SQRT2))
        mean = jnp.mean(z, axis=-1, keepdims=True)
        var = jnp.mean((z - mean) ** 2, axis=-1, keepdims=True)
        h = (z - mean) * jax.lax.rsqrt(var + eps) * gamma + beta
    return h


if __name__ == "__main__":
    key = jax.random.PRNGKey(0)
    kx, kp = jax.random.split(key)

    # Small but TPU-friendly shapes: lane-dense (multiple-of-128) feature dims,
    # batch a multiple of 8 so tiles are unmasked and the M grid has >= 2 steps.
    batch = 64
    embedding_dim = 256
    hidden_dims = [256, 128]

    x = jax.random.normal(kx, (batch, embedding_dim), jnp.float32)

    # f32 "master" params (PyTorch-equivalent init); bf16 weight copies for the MXU.
    params_f32 = init_mlp_params(kp, embedding_dim, hidden_dims,
                                 weight_dtype=jnp.float32)
    params_bf16 = [(w.astype(jnp.bfloat16), b, g, be)
                   for (w, b, g, be) in params_f32]

    ref_f32 = mlp_forward_ref(x, params_f32)
    ref_bf16 = mlp_forward_ref(x, params_bf16, matmul_dtype=jnp.bfloat16)

    # bf16-MXU fast path: whole stack fused into a single pallas_call.
    out_fused = jax.block_until_ready(mlp_forward(x, params_bf16, fuse=True))
    # bf16-MXU fast path: per-layer M/K-tiled kernels with f32 accumulator.
    out_tiled = jax.block_until_ready(mlp_forward(x, params_bf16, fuse=False))

    assert out_fused.shape == (batch, hidden_dims[-1])
    assert out_tiled.shape == (batch, hidden_dims[-1])

    # Tight check against an emulated bf16-matmul reference (same arithmetic).
    assert jnp.allclose(out_fused, ref_bf16, atol=2e-3, rtol=2e-3), \
        "fused kernel mismatch vs bf16 reference"
    assert jnp.allclose(out_tiled, ref_bf16, atol=2e-3, rtol=2e-3), \
        "tiled kernel mismatch vs bf16 reference"
    # Looser sanity check against the full-f32 reference (bf16 MXU operands).
    assert jnp.allclose(out_fused, ref_f32, atol=5e-2, rtol=5e-2), \
        "fused kernel mismatch vs f32 reference"
    assert jnp.allclose(out_tiled, ref_f32, atol=5e-2, rtol=5e-2), \
        "tiled kernel mismatch vs f32 reference"

    print("KERNEL_OK")
</pallas_src>

<mosaic_0001>
module attributes {stable_mosaic.version = 11 : i64} {
  func.func @_mlp_fused_kernel(%arg0: i32, %arg1: memref<32x256xf32, #tpu.memory_space<vmem>>, %arg2: memref<256x256xbf16, #tpu.memory_space<vmem>>, %arg3: memref<1x256xf32, #tpu.memory_space<vmem>>, %arg4: memref<1x256xf32, #tpu.memory_space<vmem>>, %arg5: memref<1x256xf32, #tpu.memory_space<vmem>>, %arg6: memref<256x128xbf16, #tpu.memory_space<vmem>>, %arg7: memref<1x128xf32, #tpu.memory_space<vmem>>, %arg8: memref<1x128xf32, #tpu.memory_space<vmem>>, %arg9: memref<1x128xf32, #tpu.memory_space<vmem>>, %arg10: memref<32x128xf32, #tpu.memory_space<vmem>>) attributes {dimension_semantics = [#tpu.dimension_semantics<parallel>], iteration_bounds = array<i64: 2>, scalar_prefetch = 0 : i64, scratch_operands = 0 : i64, tpu.core_type = #tpu.core_type<tc>, window_params = [{transform_indices = @transform_0, window_bounds = array<i64: 32, 256>}, {pipeline_mode = #tpu.pipeline_mode<synchronous>, transform_indices = @transform_1, window_bounds = array<i64: 256, 256>}, {pipeline_mode = #tpu.pipeline_mode<synchronous>, transform_indices = @transform_2, window_bounds = array<i64: 1, 256>}, {pipeline_mode = #tpu.pipeline_mode<synchronous>, transform_indices = @transform_3, window_bounds = array<i64: 1, 256>}, {pipeline_mode = #tpu.pipeline_mode<synchronous>, transform_indices = @transform_4, window_bounds = array<i64: 1, 256>}, {pipeline_mode = #tpu.pipeline_mode<synchronous>, transform_indices = @transform_5, window_bounds = array<i64: 256, 128>}, {pipeline_mode = #tpu.pipeline_mode<synchronous>, transform_indices = @transform_6, window_bounds = array<i64: 1, 128>}, {pipeline_mode = #tpu.pipeline_mode<synchronous>, transform_indices = @transform_7, window_bounds = array<i64: 1, 128>}, {pipeline_mode = #tpu.pipeline_mode<synchronous>, transform_indices = @transform_8, window_bounds = array<i64: 1, 128>}, {transform_indices = @transform_9, window_bounds = array<i64: 32, 128>}]} {
    %c0 = arith.constant 0 : index
    %c0_0 = arith.constant 0 : index
    %0 = vector.load %arg1[%c0, %c0_0] : memref<32x256xf32, #tpu.memory_space<vmem>>, vector<32x256xf32>
    %1 = arith.truncf %0 : vector<32x256xf32> to vector<32x256xbf16>
    %c0_1 = arith.constant 0 : index
    %c0_2 = arith.constant 0 : index
    %2 = vector.load %arg2[%c0_1, %c0_2] : memref<256x256xbf16, #tpu.memory_space<vmem>>, vector<256x256xbf16>
    %cst = arith.constant dense<0.000000e+00> : vector<32x256xf32>
    %3 = tpu.matmul %1, %2, %cst {dimension_numbers = #tpu.dot_dimension_numbers<[1], [0], [0], [1], [0, 0, 1, 1], [], []>} : vector<32x256xbf16>, vector<256x256xbf16>, vector<32x256xf32> -> vector<32x256xf32>
    %c0_3 = arith.constant 0 : index
    %c0_4 = arith.constant 0 : index
    %4 = vector.load %arg3[%c0_3, %c0_4] : memref<1x256xf32, #tpu.memory_space<vmem>>, vector<1x256xf32>
    %5 = vector.broadcast %4 : vector<1x256xf32> to vector<32x256xf32>
    %6 = arith.addf %3, %5 : vector<32x256xf32>
    %cst_5 = arith.constant 5.000000e-01 : f32
    %7 = vector.broadcast %cst_5 : f32 to vector<32x256xf32>
    %8 = arith.mulf %7, %6 : vector<32x256xf32>
    %cst_6 = arith.constant 0.707106769 : f32
    %9 = vector.broadcast %cst_6 : f32 to vector<32x256xf32>
    %10 = arith.mulf %6, %9 : vector<32x256xf32>
    %11 = math.erf %10 : vector<32x256xf32>
    %cst_7 = arith.constant 1.000000e+00 : f32
    %12 = vector.broadcast %cst_7 : f32 to vector<32x256xf32>
    %13 = arith.addf %12, %11 : vector<32x256xf32>
    %14 = arith.mulf %8, %13 : vector<32x256xf32>
    %c0_8 = arith.constant 0 : index
    %c0_9 = arith.constant 0 : index
    %15 = vector.load %arg4[%c0_8, %c0_9] : memref<1x256xf32, #tpu.memory_space<vmem>>, vector<1x256xf32>
    %c0_10 = arith.constant 0 : index
    %c0_11 = arith.constant 0 : index
    %16 = vector.load %arg5[%c0_10, %c0_11] : memref<1x256xf32, #tpu.memory_space<vmem>>, vector<1x256xf32>
    %cst_12 = arith.constant dense<0.000000e+00> : vector<32xf32>
    %17 = vector.multi_reduction <add>, %14, %cst_12 [1] : vector<32x256xf32> to vector<32xf32>
    %18 = vector.shape_cast %17 : vector<32xf32> to vector<32x1xf32>
    %cst_13 = arith.constant 2.560000e+02 : f32
    %19 = vector.broadcast %cst_13 : f32 to vector<32x1xf32>
    %20 = arith.divf %18, %19 : vector<32x1xf32>
    %21 = vector.broadcast %20 : vector<32x1xf32> to vector<32x256xf32>
    %22 = arith.subf %14, %21 : vector<32x256xf32>
    %23 = arith.mulf %22, %22 : vector<32x256xf32>
    %cst_14 = arith.constant dense<0.000000e+00> : vector<32xf32>
    %24 = vector.multi_reduction <add>, %23, %cst_14 [1] : vector<32x256xf32> to vector<32xf32>
    %25 = vector.shape_cast %24 : vector<32xf32> to vector<32x1xf32>
    %cst_15 = arith.constant 2.560000e+02 : f32
    %26 = vector.broadcast %cst_15 : f32 to vector<32x1xf32>
    %27 = arith.divf %25, %26 : vector<32x1xf32>
    %cst_16 = arith.constant 9.99999974E-6 : f32
    %28 = vector.broadcast %cst_16 : f32 to vector<32x1xf32>
    %29 = arith.addf %27, %28 : vector<32x1xf32>
    %30 = math.rsqrt %29 : vector<32x1xf32>
    %31 = vector.broadcast %30 : vector<32x1xf32> to vector<32x256xf32>
    %32 = arith.mulf %22, %31 : vector<32x256xf32>
    %33 = vector.broadcast %15 : vector<1x256xf32> to vector<32x256xf32>
    %34 = arith.mulf %32, %33 : vector<32x256xf32>
    %35 = vector.broadcast %16 : vector<1x256xf32> to vector<32x256xf32>
    %36 = arith.addf %34, %35 : vector<32x256xf32>
    %37 = arith.truncf %36 : vector<32x256xf32> to vector<32x256xbf16>
    %c0_17 = arith.constant 0 : index
    %c0_18 = arith.constant 0 : index
    %38 = vector.load %arg6[%c0_17, %c0_18] : memref<256x128xbf16, #tpu.memory_space<vmem>>, vector<256x128xbf16>
    %cst_19 = arith.constant dense<0.000000e+00> : vector<32x128xf32>
    %39 = tpu.matmul %37, %38, %cst_19 {dimension_numbers = #tpu.dot_dimension_numbers<[1], [0], [0], [1], [0, 0, 1, 1], [], []>} : vector<32x256xbf16>, vector<256x128xbf16>, vector<32x128xf32> -> vector<32x128xf32>
    %c0_20 = arith.constant 0 : index
    %c0_21 = arith.constant 0 : index
    %40 = vector.load %arg7[%c0_20, %c0_21] : memref<1x128xf32, #tpu.memory_space<vmem>>, vector<1x128xf32>
    %41 = vector.broadcast %40 : vector<1x128xf32> to vector<32x128xf32>
    %42 = arith.addf %39, %41 : vector<32x128xf32>
    %cst_22 = arith.constant 5.000000e-01 : f32
    %43 = vector.broadcast %cst_22 : f32 to vector<32x128xf32>
    %44 = arith.mulf %43, %42 : vector<32x128xf32>
    %cst_23 = arith.constant 0.707106769 : f32
    %45 = vector.broadcast %cst_23 : f32 to vector<32x128xf32>
    %46 = arith.mulf %42, %45 : vector<32x128xf32>
    %47 = math.erf %46 : vector<32x128xf32>
    %cst_24 = arith.constant 1.000000e+00 : f32
    %48 = vector.broadcast %cst_24 : f32 to vector<32x128xf32>
    %49 = arith.addf %48, %47 : vector<32x128xf32>
    %50 = arith.mulf %44, %49 : vector<32x128xf32>
    %c0_25 = arith.constant 0 : index
    %c0_26 = arith.constant 0 : index
    %51 = vector.load %arg8[%c0_25, %c0_26] : memref<1x128xf32, #tpu.memory_space<vmem>>, vector<1x128xf32>
    %c0_27 = arith.constant 0 : index
    %c0_28 = arith.constant 0 : index
    %52 = vector.load %arg9[%c0_27, %c0_28] : memref<1x128xf32, #tpu.memory_space<vmem>>, vector<1x128xf32>
    %cst_29 = arith.constant dense<0.000000e+00> : vector<32xf32>
    %53 = vector.multi_reduction <add>, %50, %cst_29 [1] : vector<32x128xf32> to vector<32xf32>
    %54 = vector.shape_cast %53 : vector<32xf32> to vector<32x1xf32>
    %cst_30 = arith.constant 1.280000e+02 : f32
    %55 = vector.broadcast %cst_30 : f32 to vector<32x1xf32>
    %56 = arith.divf %54, %55 : vector<32x1xf32>
    %57 = vector.broadcast %56 : vector<32x1xf32> to vector<32x128xf32>
    %58 = arith.subf %50, %57 : vector<32x128xf32>
    %59 = arith.mulf %58, %58 : vector<32x128xf32>
    %cst_31 = arith.constant dense<0.000000e+00> : vector<32xf32>
    %60 = vector.multi_reduction <add>, %59, %cst_31 [1] : vector<32x128xf32> to vector<32xf32>
    %61 = vector.shape_cast %60 : vector<32xf32> to vector<32x1xf32>
    %cst_32 = arith.constant 1.280000e+02 : f32
    %62 = vector.broadcast %cst_32 : f32 to vector<32x1xf32>
    %63 = arith.divf %61, %62 : vector<32x1xf32>
    %cst_33 = arith.constant 9.99999974E-6 : f32
    %64 = vector.broadcast %cst_33 : f32 to vector<32x1xf32>
    %65 = arith.addf %63, %64 : vector<32x1xf32>
    %66 = math.rsqrt %65 : vector<32x1xf32>
    %67 = vector.broadcast %66 : vector<32x1xf32> to vector<32x128xf32>
    %68 = arith.mulf %58, %67 : vector<32x128xf32>
    %69 = vector.broadcast %51 : vector<1x128xf32> to vector<32x128xf32>
    %70 = arith.mulf %68, %69 : vector<32x128xf32>
    %71 = vector.broadcast %52 : vector<1x128xf32> to vector<32x128xf32>
    %72 = arith.addf %70, %71 : vector<32x128xf32>
    %c0_34 = arith.constant 0 : index
    %c0_35 = arith.constant 0 : index
    %73 = vector.load %arg10[%c0_34, %c0_35] : memref<32x128xf32, #tpu.memory_space<vmem>>, vector<32x128xf32>
    tpu.vector_store %arg10[%c0_34, %c0_35], %72 {strides = array<i32>} : memref<32x128xf32, #tpu.memory_space<vmem>>, vector<32x128xf32>,
    return
  }
  func.func @transform_0(%arg0: i32) -> (i32, i32) {
    %c0_i32 = arith.constant 0 : i32
    %c0_i32_0 = arith.constant 0 : i32
    return %arg0, %c0_i32 : i32, i32
  }
  func.func @transform_1(%arg0: i32) -> (i32, i32) {
    %c0_i32 = arith.constant 0 : i32
    %c0_i32_0 = arith.constant 0 : i32
    %c0_i32_1 = arith.constant 0 : i32
    return %c0_i32, %c0_i32_0 : i32, i32
  }
  func.func @transform_2(%arg0: i32) -> (i32, i32) {
    %c0_i32 = arith.constant 0 : i32
    %c0_i32_0 = arith.constant 0 : i32
    %c0_i32_1 = arith.constant 0 : i32
    return %c0_i32, %c0_i32_0 : i32, i32
  }
  func.func @transform_3(%arg0: i32) -> (i32, i32) {
    %c0_i32 = arith.constant 0 : i32
    %c0_i32_0 = arith.constant 0 : i32
    %c0_i32_1 = arith.constant 0 : i32
    return %c0_i32, %c0_i32_0 : i32, i32
  }
  func.func @transform_4(%arg0: i32) -> (i32, i32) {
    %c0_i32 = arith.constant 0 : i32
    %c0_i32_0 = arith.constant 0 : i32
    %c0_i32_1 = arith.constant 0 : i32
    return %c0_i32, %c0_i32_0 : i32, i32
  }
  func.func @transform_5(%arg0: i32) -> (i32, i32) {
    %c0_i32 = arith.constant 0 : i32
    %c0_i32_0 = arith.constant 0 : i32
    %c0_i32_1 = arith.constant 0 : i32
    return %c0_i32, %c0_i32_0 : i32, i32
  }
  func.func @transform_6(%arg0: i32) -> (i32, i32) {
    %c0_i32 = arith.constant 0 : i32
    %c0_i32_0 = arith.constant 0 : i32
    %c0_i32_1 = arith.constant 0 : i32
    return %c0_i32, %c0_i32_0 : i32, i32
  }
  func.func @transform_7(%arg0: i32) -> (i32, i32) {
    %c0_i32 = arith.constant 0 : i32
    %c0_i32_0 = arith.constant 0 : i32
    %c0_i32_1 = arith.constant 0 : i32
    return %c0_i32, %c0_i32_0 : i32, i32
  }
  func.func @transform_8(%arg0: i32) -> (i32, i32) {
    %c0_i32 = arith.constant 0 : i32
    %c0_i32_0 = arith.constant 0 : i32
    %c0_i32_1 = arith.constant 0 : i32
    return %c0_i32, %c0_i32_0 : i32, i32
  }
  func.func @transform_9(%arg0: i32) -> (i32, i32) {
    %c0_i32 = arith.constant 0 : i32
    %c0_i32_0 = arith.constant 0 : i32
    return %arg0, %c0_i32 : i32, i32
  }
}

</mosaic_0001>

<llo_original>
// kernel: tpu_custom_call.1
$region0: #{tpu_custom_call.1}
  #allocation0 [shape = 'u32[]', space=smem, size = 0x4, offset = 0x4, fixed_abs, tag = 'smem constant byte address 0x4 - core index']
  #allocation1 [shape = 'u32[72,128]{1,0:T(1,128)}', space=vmem, size = 0x9000, scoped, tag = 'internal scratch']
  %s0 = inlined_call_operand.hbm [shape: f32[64,256], index: 0, kind: input, shape index: {}]
  %s1 = inlined_call_operand.hbm [shape: bf16[256,256], index: 1, kind: input, shape index: {}]
  %s2 = inlined_call_operand.hbm [shape: f32[1,256], index: 2, kind: input, shape index: {}]
  %s3 = inlined_call_operand.vmem [shape: f32[1,256], index: 3, kind: input, shape index: {}]
  %s4 = inlined_call_operand.hbm [shape: f32[1,256], index: 4, kind: input, shape index: {}]
  %s5 = inlined_call_operand.hbm [shape: bf16[256,128], index: 5, kind: input, shape index: {}]
  %s6 = inlined_call_operand.vmem [shape: f32[1,128], index: 6, kind: input, shape index: {}]
  %s7 = inlined_call_operand.vmem [shape: f32[1,128], index: 7, kind: input, shape index: {}]
  %s8 = inlined_call_operand.vmem [shape: f32[1,128], index: 8, kind: input, shape index: {}]
  %s9 = inlined_call_operand.hbm [shape: f32[64,128], index: 9, kind: output, shape index: {}]
  %s10 = sld [smem:[#allocation0]]
  $region89: #{tpu_custom_call.1} parent=0
    _
  %s12 = ssub.s32 1, %s10
  %s13 = scalar_select 0, %s12, %s10
  $region1: #{tpu_custom_call.1} parent=0
    #allocation2 [shape = 'u8[65536]{0}', space=vmem, size = 0x10000, scoped, tag = 'input window, operand 0']
    #allocation3 [shape = 's32[2]{0}', space=sflag, size = 0x8, scoped, tag = 'scoped memory for tpu_custom_call.1']
    #allocation4 [shape = 's32[2]{0}', space=sflag, size = 0x8, scoped, tag = 'scoped memory for tpu_custom_call.1']
    #allocation5 [shape = 'u8[131072]{0}', space=vmem, size = 0x20000, scoped, tag = 'input window, operand 1, single buffered']
    #allocation6 [shape = 's32[1]{0}', space=sflag, size = 0x4, scoped, tag = 'scoped memory for tpu_custom_call.1']
    #allocation7 [shape = 'u8[1024]{0}', space=vmem, size = 0x400, scoped, tag = 'input window, operand 2, single buffered']
    #allocation8 [shape = 'u8[1024]{0}', space=vmem, size = 0x400, scoped, tag = 'input window, operand 4, single buffered']
    #allocation9 [shape = 's32[1]{0}', space=sflag, size = 0x4, scoped, tag = 'scoped memory for tpu_custom_call.1']
    #allocation10 [shape = 'u8[65536]{0}', space=vmem, size = 0x10000, scoped, tag = 'input window, operand 5, single buffered']
    #allocation11 [shape = 'u8[32768]{0}', space=vmem, size = 0x8000, scoped, tag = 'output window, operand 0']
    %14 = vsyncpa [#allocation3], 0
    %s15 = scalar_lea.sflag [#allocation3], 1
    %16 = vsyncpa %s15, 0
    %17 = vsyncpa [#allocation6], 0
    %18 = vsyncpa [#allocation9], 0
    %19 = vsyncpa [#allocation4], 0
    %s20 = scalar_lea.sflag [#allocation4], 1
    %21 = vsyncpa %s20, 0
    loop: start=0, step=1, limit=4
    $region2: #{tpu_custom_call.1} parent=1 // loop_pre_header
      _
    $region3: #{tpu_custom_call.1} parent=1 // loop_header
      %s23 = sphi 0, %s27
      %p24 = scmp.ge.s32.totalorder %s23, 4
      %s33 = sphi 0, %s35
      %s36 = sphi 0, %s33
      %s37 = sphi 0, %s36
      %s53 = sphi 0, %s37
      %s57 = sphi 0, %s57
      %s59 = sphi 0, %s57
      %s60 = sphi 0, %s59
      %s74 = sphi 0, %s60
      %s78 = sphi 0, %s78
      %s80 = sphi 0, %s78
      %s81 = sphi 0, %s80
      %s95 = sphi 0, %s81
      %s99 = sphi 0, %s99
      %s101 = sphi 0, %s99
      %s102 = sphi 0, %s101
      %s116 = sphi 0, %s102
      %s120 = sphi 0, %s120
      %s122 = sphi 0, %s120
      %s123 = sphi 0, %s122
      %s137 = sphi 0, %s123
      %s141 = sphi 0, %s141
      %s143 = sphi 0, %s141
      %s144 = sphi 0, %s143
      %s158 = sphi 0, %s144
      %s162 = sphi 0, %s162
      %s164 = sphi 0, %s162
      %s165 = sphi 0, %s164
      %s179 = sphi 0, %s165
      %s183 = sphi 0, %s183
      %s185 = sphi 0, %s183
      %s186 = sphi 0, %s185
      %s200 = sphi 0, %s186
      %s204 = sphi 0, %s204
      %s206 = sphi 0, %s204
      %s207 = sphi 0, %s206
      %s221 = sphi 0, %s207
      %s227 = sphi 0, %s229
      %s230 = sphi 0, %s227
      %s231 = sphi 0, %s230
      %s247 = sphi 0, %s231
    $region4: #{tpu_custom_call.1} parent=1 // loop_header_branch
      %26 = sbr.rel (%p24) target = $region8
    $region5: #{tpu_custom_call.1} parent=1 // loop_body
      %s28 = ssub.s32 %s23, 1
      %s29 = ssub.s32 %s23, 2
      %s30 = sadd.s32 %s23, 1
      %s31 = ssub.s32 %s23, %s30
      %p32 = scmp.eq.s32.totalorder %s31, 0
      %s34 = sadd.s32 %s33, 1
      %s35 = scalar_select %p32, %s33, %s34
      %p38 = pneg %p32
      %p39 = scmp.eq.s32.totalorder %s23, 1
      %p40 = por %p38, %p39
      %p41 = scmp.ne.s32.totalorder %s33, %s36
      %p42 = scmp.eq.s32.totalorder %s23, 0
      %p43 = por %p41, %p42
      %p44 = scmp.ne.s32.totalorder %s33, %s36
      %p45 = scmp.eq.s32.totalorder %s28, 1
      %p46 = por %p44, %p45
      %p47 = scmp.ne.s32.totalorder %s36, %s37
      %p48 = scmp.eq.s32.totalorder %s28, 0
      %p49 = por %p47, %p48
      %p50 = scmp.ne.s32.totalorder %s36, %s37
      %p51 = scmp.eq.s32.totalorder %s29, 1
      %p52 = por %p50, %p51
      %p54 = scmp.ne.s32.totalorder %s37, %s53
      %p55 = scmp.eq.s32.totalorder %s29, 0
      %p56 = por %p54, %p55
      %s58 = sadd.s32 %s57, 1
      %p61 = scmp.eq.s32.totalorder %s23, 1
      %p62 = scmp.ne.s32.totalorder %s57, %s59
      %p63 = scmp.eq.s32.totalorder %s23, 0
      %p64 = por %p62, %p63
      %p65 = scmp.ne.s32.totalorder %s57, %s59
      %p66 = scmp.eq.s32.totalorder %s28, 1
      %p67 = por %p65, %p66
      %p68 = scmp.ne.s32.totalorder %s59, %s60
      %p69 = scmp.eq.s32.totalorder %s28, 0
      %p70 = por %p68, %p69
      %p71 = scmp.ne.s32.totalorder %s59, %s60
      %p72 = scmp.eq.s32.totalorder %s29, 1
      %p73 = por %p71, %p72
      %p75 = scmp.ne.s32.totalorder %s60, %s74
      %p76 = scmp.eq.s32.totalorder %s29, 0
      %p77 = por %p75, %p76
      %s79 = sadd.s32 %s78, 1
      %p82 = scmp.eq.s32.totalorder %s23, 1
      %p83 = scmp.ne.s32.totalorder %s78, %s80
      %p84 = scmp.eq.s32.totalorder %s23, 0
      %p85 = por %p83, %p84
      %p86 = scmp.ne.s32.totalorder %s78, %s80
      %p87 = scmp.eq.s32.totalorder %s28, 1
      %p88 = por %p86, %p87
      %p89 = scmp.ne.s32.totalorder %s80, %s81
      %p90 = scmp.eq.s32.totalorder %s28, 0
      %p91 = por %p89, %p90
      %p92 = scmp.ne.s32.totalorder %s80, %s81
      %p93 = scmp.eq.s32.totalorder %s29, 1
      %p94 = por %p92, %p93
      %p96 = scmp.ne.s32.totalorder %s81, %s95
      %p97 = scmp.eq.s32.totalorder %s29, 0
      %p98 = por %p96, %p97
      %s100 = sadd.s32 %s99, 1
      %p103 = scmp.eq.s32.totalorder %s23, 1
      %p104 = scmp.ne.s32.totalorder %s99, %s101
      %p105 = scmp.eq.s32.totalorder %s23, 0
      %p106 = por %p104, %p105
      %p107 = scmp.ne.s32.totalorder %s99, %s101
      %p108 = scmp.eq.s32.totalorder %s28, 1
      %p109 = por %p107, %p108
      %p110 = scmp.ne.s32.totalorder %s101, %s102
      %p111 = scmp.eq.s32.totalorder %s28, 0
      %p112 = por %p110, %p111
      %p113 = scmp.ne.s32.totalorder %s101, %s102
      %p114 = scmp.eq.s32.totalorder %s29, 1
      %p115 = por %p113, %p114
      %p117 = scmp.ne.s32.totalorder %s102, %s116
      %p118 = scmp.eq.s32.totalorder %s29, 0
      %p119 = por %p117, %p118
      %s121 = sadd.s32 %s120, 1
      %p124 = scmp.eq.s32.totalorder %s23, 1
      %p125 = scmp.ne.s32.totalorder %s120, %s122
      %p126 = scmp.eq.s32.totalorder %s23, 0
      %p127 = por %p125, %p126
      %p128 = scmp.ne.s32.totalorder %s120, %s122
      %p129 = scmp.eq.s32.totalorder %s28, 1
      %p130 = por %p128, %p129
      %p131 = scmp.ne.s32.totalorder %s122, %s123
      %p132 = scmp.eq.s32.totalorder %s28, 0
      %p133 = por %p131, %p132
      %p134 = scmp.ne.s32.totalorder %s122, %s123
      %p135 = scmp.eq.s32.totalorder %s29, 1
      %p136 = por %p134, %p135
      %p138 = scmp.ne.s32.totalorder %s123, %s137
      %p139 = scmp.eq.s32.totalorder %s29, 0
      %p140 = por %p138, %p139
      %s142 = sadd.s32 %s141, 1
      %p145 = scmp.eq.s32.totalorder %s23, 1
      %p146 = scmp.ne.s32.totalorder %s141, %s143
      %p147 = scmp.eq.s32.totalorder %s23, 0
      %p148 = por %p146, %p147
      %p149 = scmp.ne.s32.totalorder %s141, %s143
      %p150 = scmp.eq.s32.totalorder %s28, 1
      %p151 = por %p149, %p150
      %p152 = scmp.ne.s32.totalorder %s143, %s144
      %p153 = scmp.eq.s32.totalorder %s28, 0
      %p154 = por %p152, %p153
      %p155 = scmp.ne.s32.totalorder %s143, %s144
      %p156 = scmp.eq.s32.totalorder %s29, 1
      %p157 = por %p155, %p156
      %p159 = scmp.ne.s32.totalorder %s144, %s158
      %p160 = scmp.eq.s32.totalorder %s29, 0
      %p161 = por %p159, %p160
      %s163 = sadd.s32 %s162, 1
      %p166 = scmp.eq.s32.totalorder %s23, 1
      %p167 = scmp.ne.s32.totalorder %s162, %s164
      %p168 = scmp.eq.s32.totalorder %s23, 0
      %p169 = por %p167, %p168
      %p170 = scmp.ne.s32.totalorder %s162, %s164
      %p171 = scmp.eq.s32.totalorder %s28, 1
      %p172 = por %p170, %p171
      %p173 = scmp.ne.s32.totalorder %s164, %s165
      %p174 = scmp.eq.s32.totalorder %s28, 0
      %p175 = por %p173, %p174
      %p176 = scmp.ne.s32.totalorder %s164, %s165
      %p177 = scmp.eq.s32.totalorder %s29, 1
      %p178 = por %p176, %p177
      %p180 = scmp.ne.s32.totalorder %s165, %s179
      %p181 = scmp.eq.s32.totalorder %s29, 0
      %p182 = por %p180, %p181
      %s184 = sadd.s32 %s183, 1
      %p187 = scmp.eq.s32.totalorder %s23, 1
      %p188 = scmp.ne.s32.totalorder %s183, %s185
      %p189 = scmp.eq.s32.totalorder %s23, 0
      %p190 = por %p188, %p189
      %p191 = scmp.ne.s32.totalorder %s183, %s185
      %p192 = scmp.eq.s32.totalorder %s28, 1
      %p193 = por %p191, %p192
      %p194 = scmp.ne.s32.totalorder %s185, %s186
      %p195 = scmp.eq.s32.totalorder %s28, 0
      %p196 = por %p194, %p195
      %p197 = scmp.ne.s32.totalorder %s185, %s186
      %p198 = scmp.eq.s32.totalorder %s29, 1
      %p199 = por %p197, %p198
      %p201 = scmp.ne.s32.totalorder %s186, %s200
      %p202 = scmp.eq.s32.totalorder %s29, 0
      %p203 = por %p201, %p202
      %s205 = sadd.s32 %s204, 1
      %p208 = scmp.eq.s32.totalorder %s23, 1
      %p209 = scmp.ne.s32.totalorder %s204, %s206
      %p210 = scmp.eq.s32.totalorder %s23, 0
      %p211 = por %p209, %p210
      %p212 = scmp.ne.s32.totalorder %s204, %s206
      %p213 = scmp.eq.s32.totalorder %s28, 1
      %p214 = por %p212, %p213
      %p215 = scmp.ne.s32.totalorder %s206, %s207
      %p216 = scmp.eq.s32.totalorder %s28, 0
      %p217 = por %p215, %p216
      %p218 = scmp.ne.s32.totalorder %s206, %s207
      %p219 = scmp.eq.s32.totalorder %s29, 1
      %p220 = por %p218, %p219
      %p222 = scmp.ne.s32.totalorder %s207, %s221
      %p223 = scmp.eq.s32.totalorder %s29, 0
      %p224 = por %p222, %p223
      %s225 = ssub.s32 %s23, %s30
      %p226 = scmp.eq.s32.totalorder %s225, 0
      %s228 = sadd.s32 %s227, 1
      %s229 = scalar_select %p226, %s227, %s228
      %p232 = pneg %p226
      %p233 = scmp.eq.s32.totalorder %s23, 1
      %p234 = por %p232, %p233
      %p235 = scmp.ne.s32.totalorder %s227, %s230
      %p236 = scmp.eq.s32.totalorder %s23, 0
      %p237 = por %p235, %p236
      %p238 = scmp.ne.s32.totalorder %s227, %s230
      %p239 = scmp.eq.s32.totalorder %s28, 1
      %p240 = por %p238, %p239
      %p241 = scmp.ne.s32.totalorder %s230, %s231
      %p242 = scmp.eq.s32.totalorder %s28, 0
      %p243 = por %p241, %p242
      %p244 = scmp.ne.s32.totalorder %s230, %s231
      %p245 = scmp.eq.s32.totalorder %s29, 1
      %p246 = por %p244, %p245
      %p248 = scmp.ne.s32.totalorder %s231, %s247
      %p249 = scmp.eq.s32.totalorder %s29, 0
      %p250 = por %p248, %p249
      %p251 = scmp.le.s32.totalorder 1, %s23
      %p252 = scmp.lt.s32.totalorder %s23, 3
      %p253 = pnand %p251, %p252
      %p254 = pneg %p253
      // Predicated region
      $region9: #{tpu_custom_call.1} parent=5 // pred_check
        _
      $region10: #{tpu_custom_call.1} parent=5 // pred_check_branch
        %256 = sbr.rel (%p253) target = $region12
      $region11: #{tpu_custom_call.1} parent=5 // pred_region
        %s257 = ssub.s32 %s23, 1
        // Predicated region
        $region13: #{tpu_custom_call.1} parent=11 // pred_check
          %p258 = pneg %p70
        $region14: #{tpu_custom_call.1} parent=11 // pred_check_branch
          %260 = sbr.rel (%p258) target = $region16
        $region15: #{tpu_custom_call.1} parent=11 // pred_region
          %262 = vsyncadd [#allocation6], 0
          %s263 = sshll.u32 %s1, 4
          %s264 = int_to_ptr.hbm [resolvable:$true] %s263
          %s265 = sshll.u32 [#allocation5], 4
          %s266 = int_to_ptr.vmem [resolvable:$true] %s265
          %271 = dma.hbm_to_vmem [thread:$0]  %s264, 4096, %s266, [#allocation6], 128, 128, 8
        $region16: #{tpu_custom_call.1} parent=11 // pred_fallthru
          _
        // Predicated region
        $region17: #{tpu_custom_call.1} parent=11 // pred_check
          %p272 = pneg %p91
        $region18: #{tpu_custom_call.1} parent=11 // pred_check_branch
          %274 = sbr.rel (%p272) target = $region20
        $region19: #{tpu_custom_call.1} parent=11 // pred_region
          %276 = vsyncadd [#allocation6], 0
          %s278 = sshll.u32 %s2, 4
          %s279 = int_to_ptr.hbm [resolvable:$true] %s278
          %s280 = sshll.u32 [#allocation7], 4
          %s281 = int_to_ptr.vmem [resolvable:$true] %s280
          %283 = dma.hbm_to_vmem [thread:$0]  %s279, 32, %s281, [#allocation6]
        $region20: #{tpu_custom_call.1} parent=11 // pred_fallthru
          _
        // Predicated region
        $region21: #{tpu_custom_call.1} parent=11 // pred_check
          %p284 = pneg %p112
        $region22: #{tpu_custom_call.1} parent=11 // pred_check_branch
          %286 = sbr.rel (%p284) target = $region24
        $region23: #{tpu_custom_call.1} parent=11 // pred_region
          _
        $region24: #{tpu_custom_call.1} parent=11 // pred_fallthru
          _
        // Predicated region
        $region25: #{tpu_custom_call.1} parent=11 // pred_check
          %p287 = pneg %p133
        $region26: #{tpu_custom_call.1} parent=11 // pred_check_branch
          %289 = sbr.rel (%p287) target = $region28
        $region27: #{tpu_custom_call.1} parent=11 // pred_region
          %291 = vsyncadd [#allocation9], 0
          %s293 = sshll.u32 %s4, 4
          %s294 = int_to_ptr.hbm [resolvable:$true] %s293
          %s295 = sshll.u32 [#allocation8], 4
          %s296 = int_to_ptr.vmem [resolvable:$true] %s295
          %298 = dma.hbm_to_vmem [thread:$0]  %s294, 32, %s296, [#allocation9]
        $region28: #{tpu_custom_call.1} parent=11 // pred_fallthru
          _
        // Predicated region
        $region29: #{tpu_custom_call.1} parent=11 // pred_check
          %p299 = pneg %p154
        $region30: #{tpu_custom_call.1} parent=11 // pred_check_branch
          %301 = sbr.rel (%p299) target = $region32
        $region31: #{tpu_custom_call.1} parent=11 // pred_region
          %303 = vsyncadd [#allocation9], 0
          %s304 = sshll.u32 %s5, 4
          %s305 = int_to_ptr.hbm [resolvable:$true] %s304
          %s306 = sshll.u32 [#allocation10], 4
          %s307 = int_to_ptr.vmem [resolvable:$true] %s306
          %312 = dma.hbm_to_vmem [thread:$0]  %s305, 2048, %s307, [#allocation9], 64, 64, 4
        $region32: #{tpu_custom_call.1} parent=11 // pred_fallthru
          _
        // Predicated region
        $region33: #{tpu_custom_call.1} parent=11 // pred_check
          %p313 = pneg %p175
        $region34: #{tpu_custom_call.1} parent=11 // pred_check_branch
          %315 = sbr.rel (%p313) target = $region36
        $region35: #{tpu_custom_call.1} parent=11 // pred_region
          _
        $region36: #{tpu_custom_call.1} parent=11 // pred_fallthru
          _
        // Predicated region
        $region37: #{tpu_custom_call.1} parent=11 // pred_check
          %p316 = pneg %p196
        $region38: #{tpu_custom_call.1} parent=11 // pred_check_branch
          %318 = sbr.rel (%p316) target = $region40
        $region39: #{tpu_custom_call.1} parent=11 // pred_region
          _
        $region40: #{tpu_custom_call.1} parent=11 // pred_fallthru
          _
        // Predicated region
        $region41: #{tpu_custom_call.1} parent=11 // pred_check
          %p319 = pneg %p217
        $region42: #{tpu_custom_call.1} parent=11 // pred_check_branch
          %321 = sbr.rel (%p319) target = $region44
        $region43: #{tpu_custom_call.1} parent=11 // pred_region
          _
        $region44: #{tpu_custom_call.1} parent=11 // pred_fallthru
          _
      $region12: #{tpu_custom_call.1} parent=5 // pred_fallthru
        _
      %p322 = scmp.lt.s32.totalorder %s23, 2
      // Predicated region
      $region45: #{tpu_custom_call.1} parent=5 // pred_check
        %p323 = pneg %p322
      $region46: #{tpu_custom_call.1} parent=5 // pred_check_branch
        %325 = sbr.rel (%p323) target = $region48
      $region47: #{tpu_custom_call.1} parent=5 // pred_region
        // Predicated region
        $region49: #{tpu_custom_call.1} parent=47 // pred_check
          %p326 = pneg %p43
        $region50: #{tpu_custom_call.1} parent=47 // pred_check_branch
          %328 = sbr.rel (%p326) target = $region52
        $region51: #{tpu_custom_call.1} parent=47 // pred_region
          %s329 = sand.u32 %s33, 1
          %s330 = scalar_lea.sflag [#allocation3], %s329
          %s331 = sand.u32 %s33, 1
          %s332 = smul.addr %s331, 64
          %s333 = scalar_lea.vmem [#allocation2], %s332
          %s334 = smul.u32 4, %s23
          %336 = vsyncadd %s330, 0
          %s337 = smul.addr %s334, 2
          %s338 = smul.addr %s337, 8
          %s339 = scalar_lea.hbm %s0, %s338
          %s340 = sshll.u32 %s339, 4
          %s341 = int_to_ptr.hbm [resolvable:$true] %s340
          %s342 = sshll.u32 %s333, 4
          %s343 = int_to_ptr.vmem [resolvable:$true] %s342
          %348 = dma.hbm_to_vmem [thread:$0]  %s341, 1024, %s343, %s330, 256, 256, 16
        $region52: #{tpu_custom_call.1} parent=47 // pred_fallthru
          _
      $region48: #{tpu_custom_call.1} parent=5 // pred_fallthru
        _
      %p349 = scmp.le.s32.totalorder 1, %s23
      %p350 = scmp.lt.s32.totalorder %s23, 3
      %p351 = pnand %p349, %p350
      %p352 = pneg %p351
      // Predicated region
      $region53: #{tpu_custom_call.1} parent=5 // pred_check
        _
      $region54: #{tpu_custom_call.1} parent=5 // pred_check_branch
        %354 = sbr.rel (%p351) target = $region56
      $region55: #{tpu_custom_call.1} parent=5 // pred_region
        %s355 = ssub.s32 %s23, 1
        %s356 = sand.u32 %s36, 1
        %s357 = scalar_lea.sflag [#allocation3], %s356
        %s358 = sand.u32 %s36, 1
        %s359 = smul.addr %s358, 64
        %s360 = scalar_lea.vmem [#allocation2], %s359
        // Predicated region
        $region57: #{tpu_custom_call.1} parent=55 // pred_check
          %p361 = pneg %p49
        $region58: #{tpu_custom_call.1} parent=55 // pred_check_branch
          %363 = sbr.rel (%p361) target = $region60
        $region59: #{tpu_custom_call.1} parent=55 // pred_region
          %365 = dma.done %s357, 1024
        $region60: #{tpu_custom_call.1} parent=55 // pred_fallthru
          _
        // Predicated region
        $region61: #{tpu_custom_call.1} parent=55 // pred_check
          %p366 = pneg %p70
        $region62: #{tpu_custom_call.1} parent=55 // pred_check_branch
          %368 = sbr.rel (%p366) target = $region64
        $region63: #{tpu_custom_call.1} parent=55 // pred_region
          %370 = dma.done [#allocation6], 4096
        $region64: #{tpu_custom_call.1} parent=55 // pred_fallthru
          _
        // Predicated region
        $region65: #{tpu_custom_call.1} parent=55 // pred_check
          %p371 = pneg %p91
        $region66: #{tpu_custom_call.1} parent=55 // pred_check_branch
          %373 = sbr.rel (%p371) target = $region68
        $region67: #{tpu_custom_call.1} parent=55 // pred_region
          %375 = dma.done [#allocation6], 32
        $region68: #{tpu_custom_call.1} parent=55 // pred_fallthru
          _
        // Predicated region
        $region69: #{tpu_custom_call.1} parent=55 // pred_check
          %p376 = pneg %p133
        $region70: #{tpu_custom_call.1} parent=55 // pred_check_branch
          %378 = sbr.rel (%p376) target = $region72
        $region71: #{tpu_custom_call.1} parent=55 // pred_region
          %380 = dma.done [#allocation9], 32
        $region72: #{tpu_custom_call.1} parent=55 // pred_fallthru
          _
        // Predicated region
        $region73: #{tpu_custom_call.1} parent=55 // pred_check
          %p381 = pneg %p154
        $region74: #{tpu_custom_call.1} parent=55 // pred_check_branch
          %383 = sbr.rel (%p381) target = $region76
        $region75: #{tpu_custom_call.1} parent=55 // pred_region
          %385 = dma.done [#allocation9], 2048
        $region76: #{tpu_custom_call.1} parent=55 // pred_fallthru
          _
        %s386 = sand.u32 %s36, 1
        %s387 = scalar_lea.sflag [#allocation3], %s386
        %s388 = sand.u32 %s36, 1
        %s389 = smul.addr %s388, 64
        %s390 = scalar_lea.vmem [#allocation2], %s389
        %p391 = pneg %p49
        %p392 = pneg %p46
        %p393 = pneg %p70
        %p394 = pneg %p67
        %p395 = pneg %p91
        %p396 = pneg %p88
        %p397 = pneg %p112
        %p398 = pneg %p109
        %p399 = pneg %p133
        %p400 = pneg %p130
        %p401 = pneg %p154
        %p402 = pneg %p151
        %p403 = pneg %p175
        %p404 = pneg %p172
        %p405 = pneg %p196
        %p406 = pneg %p193
        %p407 = pneg %p217
        %p408 = pneg %p214
        %p409 = pneg %p243
        %p410 = pneg %p240
        %s411 = sand.u32 %s230, 1
        %s412 = scalar_lea.sflag [#allocation4], %s411
        %s413 = sand.u32 %s230, 1
        %s414 = smul.addr %s413, 32
        %s415 = scalar_lea.vmem [#allocation11], %s414
        %s416 = smul.u32 4, %s28
        %s417 = smul.u32 4, %s28
        %v418 = vld [vmem:[%s360] sm:$0xff]
        %v419 = vld [vmem:[%s360 + $0x8] sm:$0xff]
        %v420 = vld [vmem:[%s360 + $0x10] sm:$0xff]
        %v421 = vld [vmem:[%s360 + $0x18] sm:$0xff]
        %v422 = vld [vmem:[%s360 + $0x20] sm:$0xff]
        %v423 = vld [vmem:[%s360 + $0x28] sm:$0xff]
        %v424 = vld [vmem:[%s360 + $0x30] sm:$0xff]
        %v425 = vld [vmem:[%s360 + $0x38] sm:$0xff]
        %v426 = vpack.c.bf16 %v420, %v418
        %v427 = vpack.c.bf16 %v421, %v419
        %v428 = vpack.c.bf16 %v424, %v422
        %v429 = vpack.c.bf16 %v425, %v423
        %v430 = vld [vmem:[#allocation5] sm:$0xff]
        %v431 = vld [vmem:[#allocation5 + $0x8] sm:$0xff]
        %v432 = vld [vmem:[#allocation5 + $0x10] sm:$0xff]
        %v433 = vld [vmem:[#allocation5 + $0x18] sm:$0xff]
        %v434 = vld [vmem:[#allocation5 + $0x20] sm:$0xff]
        %v435 = vld [vmem:[#allocation5 + $0x28] sm:$0xff]
        %v436 = vld [vmem:[#allocation5 + $0x30] sm:$0xff]
        %v437 = vld [vmem:[#allocation5 + $0x38] sm:$0xff]
        %v438 = vld [vmem:[#allocation5 + $0x40] sm:$0xff]
        %v439 = vld [vmem:[#allocation5 + $0x48] sm:$0xff]
        %v440 = vld [vmem:[#allocation5 + $0x50] sm:$0xff]
        %v441 = vld [vmem:[#allocation5 + $0x58] sm:$0xff]
        %v442 = vld [vmem:[#allocation5 + $0x60] sm:$0xff]
        %v443 = vld [vmem:[#allocation5 + $0x68] sm:$0xff]
        %v444 = vld [vmem:[#allocation5 + $0x70] sm:$0xff]
        %v445 = vld [vmem:[#allocation5 + $0x78] sm:$0xff]
        %v446 = vld [vmem:[#allocation5 + $0x80] sm:$0xff]
        %v447 = vld [vmem:[#allocation5 + $0x88] sm:$0xff]
        %v448 = vld [vmem:[#allocation5 + $0x90] sm:$0xff]
        %v449 = vld [vmem:[#allocation5 + $0x98] sm:$0xff]
        %v450 = vld [vmem:[#allocation5 + $0xa0] sm:$0xff]
        %v451 = vld [vmem:[#allocation5 + $0xa8] sm:$0xff]
        %v452 = vld [vmem:[#allocation5 + $0xb0] sm:$0xff]
        %v453 = vld [vmem:[#allocation5 + $0xb8] sm:$0xff]
        %v454 = vld [vmem:[#allocation5 + $0xc0] sm:$0xff]
        %v455 = vld [vmem:[#allocation5 + $0xc8] sm:$0xff]
        %v456 = vld [vmem:[#allocation5 + $0xd0] sm:$0xff]
        %v457 = vld [vmem:[#allocation5 + $0xd8] sm:$0xff]
        %v458 = vld [vmem:[#allocation5 + $0xe0] sm:$0xff]
        %v459 = vld [vmem:[#allocation5 + $0xe8] sm:$0xff]
        %v460 = vld [vmem:[#allocation5 + $0xf0] sm:$0xff]
        %v461 = vld [vmem:[#allocation5 + $0xf8] sm:$0xff]
        %v462 = vld [vmem:[#allocation7] sm:$0x3]
        %v464 = vperm.slane %v462, 0
        %v465 = vperm.slane %v462, 1
        %v500 = vunpack.c.l.b16 %v430
        %v501 = vunpack.c.h.b16 %v430
        %v502 = vunpack.c.l.b16 %v431
        %v503 = vunpack.c.h.b16 %v431
        %v504 = vunpack.c.l.b16 %v432
        %v505 = vunpack.c.h.b16 %v432
        %v506 = vunpack.c.l.b16 %v433
        %v507 = vunpack.c.h.b16 %v433
        %v508 = vunpack.c.l.b16 %v434
        %v509 = vunpack.c.h.b16 %v434
        %v510 = vunpack.c.l.b16 %v435
        %v511 = vunpack.c.h.b16 %v435
        %v512 = vunpack.c.l.b16 %v436
        %v513 = vunpack.c.h.b16 %v436
        %v514 = vunpack.c.l.b16 %v437
        %v515 = vunpack.c.h.b16 %v437
        %v516 = vunpack.c.l.b16 %v438
        %v517 = vunpack.c.h.b16 %v438
        %v518 = vunpack.c.l.b16 %v439
        %v519 = vunpack.c.h.b16 %v439
        %v520 = vunpack.c.l.b16 %v440
        %v521 = vunpack.c.h.b16 %v440
        %v522 = vunpack.c.l.b16 %v441
        %v523 = vunpack.c.h.b16 %v441
        %v524 = vunpack.c.l.b16 %v442
        %v525 = vunpack.c.h.b16 %v442
        %v526 = vunpack.c.l.b16 %v443
        %v527 = vunpack.c.h.b16 %v443
        %v528 = vunpack.c.l.b16 %v444
        %v529 = vunpack.c.h.b16 %v444
        %v530 = vunpack.c.l.b16 %v445
        %v531 = vunpack.c.h.b16 %v445
        %v532 = vunpack.c.l.b16 %v446
        %v533 = vunpack.c.h.b16 %v446
        %v534 = vunpack.c.l.b16 %v447
        %v535 = vunpack.c.h.b16 %v447
        %v536 = vunpack.c.l.b16 %v448
        %v537 = vunpack.c.h.b16 %v448
        %v538 = vunpack.c.l.b16 %v449
        %v539 = vunpack.c.h.b16 %v449
        %v540 = vunpack.c.l.b16 %v450
        %v541 = vunpack.c.h.b16 %v450
        %v542 = vunpack.c.l.b16 %v451
        %v543 = vunpack.c.h.b16 %v451
        %v544 = vunpack.c.l.b16 %v452
        %v545 = vunpack.c.h.b16 %v452
        %v546 = vunpack.c.l.b16 %v453
        %v547 = vunpack.c.h.b16 %v453
        %v548 = vunpack.c.l.b16 %v454
        %v549 = vunpack.c.h.b16 %v454
        %v550 = vunpack.c.l.b16 %v455
        %v551 = vunpack.c.h.b16 %v455
        %v552 = vunpack.c.l.b16 %v456
        %v553 = vunpack.c.h.b16 %v456
        %v554 = vunpack.c.l.b16 %v457
        %v555 = vunpack.c.h.b16 %v457
        %v556 = vunpack.c.l.b16 %v458
        %v557 = vunpack.c.h.b16 %v458
        %v558 = vunpack.c.l.b16 %v459
        %v559 = vunpack.c.h.b16 %v459
        %v560 = vunpack.c.l.b16 %v460
        %v561 = vunpack.c.h.b16 %v460
        %v562 = vunpack.c.l.b16 %v461
        %v563 = vunpack.c.h.b16 %v461
        %v564 = vpack.c.b16 %v502, %v500
        %v565 = vpack.c.b16 %v503, %v501
        %v566 = vpack.c.b16 %v506, %v504
        %v567 = vpack.c.b16 %v507, %v505
        %v568 = vpack.c.b16 %v510, %v508
        %v569 = vpack.c.b16 %v511, %v509
        %v570 = vpack.c.b16 %v514, %v512
        %v571 = vpack.c.b16 %v515, %v513
        %v572 = vpack.c.b16 %v518, %v516
        %v573 = vpack.c.b16 %v519, %v517
        %v574 = vpack.c.b16 %v522, %v520
        %v575 = vpack.c.b16 %v523, %v521
        %v576 = vpack.c.b16 %v526, %v524
        %v577 = vpack.c.b16 %v527, %v525
        %v578 = vpack.c.b16 %v530, %v528
        %v579 = vpack.c.b16 %v531, %v529
        %v580 = vpack.c.b16 %v534, %v532
        %v581 = vpack.c.b16 %v535, %v533
        %v582 = vpack.c.b16 %v538, %v536
        %v583 = vpack.c.b16 %v539, %v537
        %v584 = vpack.c.b16 %v542, %v540
        %v585 = vpack.c.b16 %v543, %v541
        %v586 = vpack.c.b16 %v546, %v544
        %v587 = vpack.c.b16 %v547, %v545
        %v588 = vpack.c.b16 %v550, %v548
        %v589 = vpack.c.b16 %v551, %v549
        %v590 = vpack.c.b16 %v554, %v552
        %v591 = vpack.c.b16 %v555, %v553
        %v592 = vpack.c.b16 %v558, %v556
        %v593 = vpack.c.b16 %v559, %v557
        %v594 = vpack.c.b16 %v562, %v560
        %v595 = vpack.c.b16 %v563, %v561
        %628 = vmatpush.bf16.msra.mxu0 %v578
        %629 = vmatpush.bf16.msra.mxu0 %v576
        %630 = vmatpush.bf16.msra.mxu0 %v574
        %631 = vmatpush.bf16.msra.mxu0 %v572
        %632 = vmatpush.bf16.msra.mxu0 %v570
        %633 = vmatpush.bf16.msra.mxu0 %v568
        %634 = vmatpush.bf16.msra.mxu0 %v566
        %635 = vmatpush.bf16.msra.mxu0 %v564
        %636 = vmatmul.bf16.gmra.mxu0 %v426
        %v637 = vpop.f32.mrf.mxu0
        %v638 = vadd.f32 %v464, %v637
        %v639 = vpop.f32.mrf.mxu0
        %v640 = vadd.f32 %v464, %v639
        %641 = vmatmul.bf16.gmra.mxu0 %v428
        %v642 = vpop.f32.mrf.mxu0
        %v643 = vadd.f32 %v464, %v642
        %v644 = vpop.f32.mrf.mxu0
        %v645 = vadd.f32 %v464, %v644
        %646 = vdwg.mxu0
        %647 = vmatpush.bf16.msra.mxu0 %v594
        %648 = vmatpush.bf16.msra.mxu0 %v592
        %649 = vmatpush.bf16.msra.mxu0 %v590
        %650 = vmatpush.bf16.msra.mxu0 %v588
        %651 = vmatpush.bf16.msra.mxu0 %v586
        %652 = vmatpush.bf16.msra.mxu0 %v584
        %653 = vmatpush.bf16.msra.mxu0 %v582
        %654 = vmatpush.bf16.msra.mxu0 %v580
        %655 = vmatmul.bf16.gmra.mxu0 %v427
        %v656 = vpop.f32.mrf.mxu0
        %v657 = vadd.f32 %v638, %v656
        %v658 = vpop.f32.mrf.mxu0
        %v659 = vadd.f32 %v640, %v658
        %660 = vmatmul.bf16.gmra.mxu0 %v429
        %v661 = vpop.f32.mrf.mxu0
        %v662 = vadd.f32 %v643, %v661
        %v663 = vpop.f32.mrf.mxu0
        %v664 = vadd.f32 %v645, %v663
        %665 = vdwg.mxu0
        %666 = vmatpush.bf16.msra.mxu0 %v579
        %667 = vmatpush.bf16.msra.mxu0 %v577
        %668 = vmatpush.bf16.msra.mxu0 %v575
        %669 = vmatpush.bf16.msra.mxu0 %v573
        %670 = vmatpush.bf16.msra.mxu0 %v571
        %671 = vmatpush.bf16.msra.mxu0 %v569
        %672 = vmatpush.bf16.msra.mxu0 %v567
        %673 = vmatpush.bf16.msra.mxu0 %v565
        %674 = vmatmul.bf16.gmra.mxu0 %v426
        %v675 = vpop.f32.mrf.mxu0
        %v676 = vadd.f32 %v465, %v675
        %v677 = vpop.f32.mrf.mxu0
        %v678 = vadd.f32 %v465, %v677
        %679 = vmatmul.bf16.gmra.mxu0 %v428
        %v680 = vpop.f32.mrf.mxu0
        %v681 = vadd.f32 %v465, %v680
        %v682 = vpop.f32.mrf.mxu0
        %v683 = vadd.f32 %v465, %v682
        %684 = vdwg.mxu0
        %685 = vmatpush.bf16.msra.mxu0 %v595
        %686 = vmatpush.bf16.msra.mxu0 %v593
        %687 = vmatpush.bf16.msra.mxu0 %v591
        %688 = vmatpush.bf16.msra.mxu0 %v589
        %689 = vmatpush.bf16.msra.mxu0 %v587
        %690 = vmatpush.bf16.msra.mxu0 %v585
        %691 = vmatpush.bf16.msra.mxu0 %v583
        %692 = vmatpush.bf16.msra.mxu0 %v581
        %693 = vmatmul.bf16.gmra.mxu0 %v427
        %v694 = vpop.f32.mrf.mxu0
        %v695 = vadd.f32 %v676, %v694
        %v696 = vpop.f32.mrf.mxu0
        %v697 = vadd.f32 %v678, %v696
        %698 = vmatmul.bf16.gmra.mxu0 %v429
        %v699 = vpop.f32.mrf.mxu0
        %v700 = vadd.f32 %v681, %v699
        %v701 = vpop.f32.mrf.mxu0
        %v702 = vadd.f32 %v683, %v701
        %703 = vdwg.mxu0
        %v704 = vmul.f32 %v657, 0.5
        %v705 = vmul.f32 %v695, 0.5
        %v706 = vmul.f32 %v659, 0.5
        %v707 = vmul.f32 %v697, 0.5
        %v708 = vmul.f32 %v662, 0.5
        %v709 = vmul.f32 %v700, 0.5
        %v710 = vmul.f32 %v664, 0.5
        %v711 = vmul.f32 %v702, 0.5
        %v712 = vmul.f32 %v657, 0.70710677
        %v713 = vmul.f32 %v695, 0.70710677
        %v714 = vmul.f32 %v659, 0.70710677
        %v715 = vmul.f32 %v697, 0.70710677
        %v716 = vmul.f32 %v662, 0.70710677
        %v717 = vmul.f32 %v700, 0.70710677
        %v718 = vmul.f32 %v664, 0.70710677
        %v719 = vmul.f32 %v702, 0.70710677
        %v720 = vmul.f32 %v712, %v712
        %v721 = vmin.f32 16.0, %v720
        %v722 = vmul.f32 %v721, 2.1237322e-06
        %v723 = vadd.f32 %v722, 0.00028619796
        %v724 = vmul.f32 %v721, %v723
        %v725 = vadd.f32 %v724, 0.0036580483
        %v726 = vmul.f32 %v721, %v725
        %v727 = vadd.f32 %v726, 0.05243302
        %v728 = vmul.f32 %v721, %v727
        %v729 = vadd.f32 %v728, 0.18741608
        %v730 = vmul.f32 %v721, %v729
        %v731 = vadd.f32 %v730, 1.1283791
        %v732 = vmul.f32 %v712, %v731
        %v733 = vmul.f32 %v721, 3.8918573e-05
        %v734 = vadd.f32 %v733, 0.001143296
        %v735 = vmul.f32 %v721, %v734
        %v736 = vadd.f32 %v735, 0.014752088
        %v737 = vmul.f32 %v721, %v736
        %v738 = vadd.f32 %v737, 0.112945676
        %v739 = vmul.f32 %v721, %v738
        %v740 = vadd.f32 %v739, 0.4994258
        %v741 = vmul.f32 %v721, %v740
        %v742 = vadd.f32 %v741, 1.0
        %v743 = vrcp.pop %v742
        %v744 = vmul.f32 %v742, %v743
        %v745 = vsub.f32 1.0, %v744
        %v746 = vmul.f32 %v743, %v745
        %v747 = vadd.f32 %v743, %v746
        %vm748 = vweird.f32 %v742
        %vm749 = vweird.f32 %v743
        %vm750 = vmor %vm748, %vm749
        %v751 = vsel %vm750, %v743, %v747
        %v752 = vand.u32 2147483647, %v742
        %vm753 = vcmp.eq.f32.partialorder %v752, 8.507059e+37
        %v754 = vand.u32 %v742, 2147483648
        %v755 = vor.u32 1.1754944e-38, %v754
        %v756 = vsel %vm753, %v755, %v751
        %v757 = vmul.f32 %v732, %v756
        %v758 = vmin.f32 %v757, 1.0
        %v759 = vmax.f32 %v758, -1.0
        %v760 = vmul.f32 %v713, %v713
        %v761 = vmin.f32 16.0, %v760
        %v762 = vmul.f32 %v761, 2.1237322e-06
        %v763 = vadd.f32 %v762, 0.00028619796
        %v764 = vmul.f32 %v761, %v763
        %v765 = vadd.f32 %v764, 0.0036580483
        %v766 = vmul.f32 %v761, %v765
        %v767 = vadd.f32 %v766, 0.05243302
        %v768 = vmul.f32 %v761, %v767
        %v769 = vadd.f32 %v768, 0.18741608
        %v770 = vmul.f32 %v761, %v769
        %v771 = vadd.f32 %v770, 1.1283791
        %v772 = vmul.f32 %v713, %v771
        %v773 = vmul.f32 %v761, 3.8918573e-05
        %v774 = vadd.f32 %v773, 0.001143296
        %v775 = vmul.f32 %v761, %v774
        %v776 = vadd.f32 %v775, 0.014752088
        %v777 = vmul.f32 %v761, %v776
        %v778 = vadd.f32 %v777, 0.112945676
        %v779 = vmul.f32 %v761, %v778
        %v780 = vadd.f32 %v779, 0.4994258
        %v781 = vmul.f32 %v761, %v780
        %v782 = vadd.f32 %v781, 1.0
        %v783 = vrcp.pop %v782
        %v784 = vmul.f32 %v782, %v783
        %v785 = vsub.f32 1.0, %v784
        %v786 = vmul.f32 %v783, %v785
        %v787 = vadd.f32 %v783, %v786
        %vm788 = vweird.f32 %v782
        %vm789 = vweird.f32 %v783
        %vm790 = vmor %vm788, %vm789
        %v791 = vsel %vm790, %v783, %v787
        %v792 = vand.u32 2147483647, %v782
        %vm793 = vcmp.eq.f32.partialorder %v792, 8.507059e+37
        %v794 = vand.u32 %v782, 2147483648
        %v795 = vor.u32 1.1754944e-38, %v794
        %v796 = vsel %vm793, %v795, %v791
        %v797 = vmul.f32 %v772, %v796
        %v798 = vmin.f32 %v797, 1.0
        %v799 = vmax.f32 %v798, -1.0
        %v800 = vmul.f32 %v714, %v714
        %v801 = vmin.f32 16.0, %v800
        %v802 = vmul.f32 %v801, 2.1237322e-06
        %v803 = vadd.f32 %v802, 0.00028619796
        %v804 = vmul.f32 %v801, %v803
        %v805 = vadd.f32 %v804, 0.0036580483
        %v806 = vmul.f32 %v801, %v805
        %v807 = vadd.f32 %v806, 0.05243302
        %v808 = vmul.f32 %v801, %v807
        %v809 = vadd.f32 %v808, 0.18741608
        %v810 = vmul.f32 %v801, %v809
        %v811 = vadd.f32 %v810, 1.1283791
        %v812 = vmul.f32 %v714, %v811
        %v813 = vmul.f32 %v801, 3.8918573e-05
        %v814 = vadd.f32 %v813, 0.001143296
        %v815 = vmul.f32 %v801, %v814
        %v816 = vadd.f32 %v815, 0.014752088
        %v817 = vmul.f32 %v801, %v816
        %v818 = vadd.f32 %v817, 0.112945676
        %v819 = vmul.f32 %v801, %v818
        %v820 = vadd.f32 %v819, 0.4994258
        %v821 = vmul.f32 %v801, %v820
        %v822 = vadd.f32 %v821, 1.0
        %v823 = vrcp.pop %v822
        %v824 = vmul.f32 %v822, %v823
        %v825 = vsub.f32 1.0, %v824
        %v826 = vmul.f32 %v823, %v825
        %v827 = vadd.f32 %v823, %v826
        %vm828 = vweird.f32 %v822
        %vm829 = vweird.f32 %v823
        %vm830 = vmor %vm828, %vm829
        %v831 = vsel %vm830, %v823, %v827
        %v832 = vand.u32 2147483647, %v822
        %vm833 = vcmp.eq.f32.partialorder %v832, 8.507059e+37
        %v834 = vand.u32 %v822, 2147483648
        %v835 = vor.u32 1.1754944e-38, %v834
        %v836 = vsel %vm833, %v835, %v831
        %v837 = vmul.f32 %v812, %v836
        %v838 = vmin.f32 %v837, 1.0
        %v839 = vmax.f32 %v838, -1.0
        %v840 = vmul.f32 %v715, %v715
        %v841 = vmin.f32 16.0, %v840
        %v842 = vmul.f32 %v841, 2.1237322e-06
        %v843 = vadd.f32 %v842, 0.00028619796
        %v844 = vmul.f32 %v841, %v843
        %v845 = vadd.f32 %v844, 0.0036580483
        %v846 = vmul.f32 %v841, %v845
        %v847 = vadd.f32 %v846, 0.05243302
        %v848 = vmul.f32 %v841, %v847
        %v849 = vadd.f32 %v848, 0.18741608
        %v850 = vmul.f32 %v841, %v849
        %v851 = vadd.f32 %v850, 1.1283791
        %v852 = vmul.f32 %v715, %v851
        %v853 = vmul.f32 %v841, 3.8918573e-05
        %v854 = vadd.f32 %v853, 0.001143296
        %v855 = vmul.f32 %v841, %v854
        %v856 = vadd.f32 %v855, 0.014752088
        %v857 = vmul.f32 %v841, %v856
        %v858 = vadd.f32 %v857, 0.112945676
        %v859 = vmul.f32 %v841, %v858
        %v860 = vadd.f32 %v859, 0.4994258
        %v861 = vmul.f32 %v841, %v860
        %v862 = vadd.f32 %v861, 1.0
        %v863 = vrcp.pop %v862
        %v864 = vmul.f32 %v862, %v863
        %v865 = vsub.f32 1.0, %v864
        %v866 = vmul.f32 %v863, %v865
        %v867 = vadd.f32 %v863, %v866
        %vm868 = vweird.f32 %v862
        %vm869 = vweird.f32 %v863
        %vm870 = vmor %vm868, %vm869
        %v871 = vsel %vm870, %v863, %v867
        %v872 = vand.u32 2147483647, %v862
        %vm873 = vcmp.eq.f32.partialorder %v872, 8.507059e+37
        %v874 = vand.u32 %v862, 2147483648
        %v875 = vor.u32 1.1754944e-38, %v874
        %v876 = vsel %vm873, %v875, %v871
        %v877 = vmul.f32 %v852, %v876
        %v878 = vmin.f32 %v877, 1.0
        %v879 = vmax.f32 %v878, -1.0
        %v880 = vmul.f32 %v716, %v716
        %v881 = vmin.f32 16.0, %v880
        %v882 = vmul.f32 %v881, 2.1237322e-06
        %v883 = vadd.f32 %v882, 0.00028619796
        %v884 = vmul.f32 %v881, %v883
        %v885 = vadd.f32 %v884, 0.0036580483
        %v886 = vmul.f32 %v881, %v885
        %v887 = vadd.f32 %v886, 0.05243302
        %v888 = vmul.f32 %v881, %v887
        %v889 = vadd.f32 %v888, 0.18741608
        %v890 = vmul.f32 %v881, %v889
        %v891 = vadd.f32 %v890, 1.1283791
        %v892 = vmul.f32 %v716, %v891
        %v893 = vmul.f32 %v881, 3.8918573e-05
        %v894 = vadd.f32 %v893, 0.001143296
        %v895 = vmul.f32 %v881, %v894
        %v896 = vadd.f32 %v895, 0.014752088
        %v897 = vmul.f32 %v881, %v896
        %v898 = vadd.f32 %v897, 0.112945676
        %v899 = vmul.f32 %v881, %v898
        %v900 = vadd.f32 %v899, 0.4994258
        %v901 = vmul.f32 %v881, %v900
        %v902 = vadd.f32 %v901, 1.0
        %v903 = vrcp.pop %v902
        %v904 = vmul.f32 %v902, %v903
        %v905 = vsub.f32 1.0, %v904
        %v906 = vmul.f32 %v903, %v905
        %v907 = vadd.f32 %v903, %v906
        %vm908 = vweird.f32 %v902
        %vm909 = vweird.f32 %v903
        %vm910 = vmor %vm908, %vm909
        %v911 = vsel %vm910, %v903, %v907
        %v912 = vand.u32 2147483647, %v902
        %vm913 = vcmp.eq.f32.partialorder %v912, 8.507059e+37
        %v914 = vand.u32 %v902, 2147483648
        %v915 = vor.u32 1.1754944e-38, %v914
        %v916 = vsel %vm913, %v915, %v911
        %v917 = vmul.f32 %v892, %v916
        %v918 = vmin.f32 %v917, 1.0
        %v919 = vmax.f32 %v918, -1.0
        %v920 = vmul.f32 %v717, %v717
        %v921 = vmin.f32 16.0, %v920
        %v922 = vmul.f32 %v921, 2.1237322e-06
        %v923 = vadd.f32 %v922, 0.00028619796
        %v924 = vmul.f32 %v921, %v923
        %v925 = vadd.f32 %v924, 0.0036580483
        %v926 = vmul.f32 %v921, %v925
        %v927 = vadd.f32 %v926, 0.05243302
        %v928 = vmul.f32 %v921, %v927
        %v929 = vadd.f32 %v928, 0.18741608
        %v930 = vmul.f32 %v921, %v929
        %v931 = vadd.f32 %v930, 1.1283791
        %v932 = vmul.f32 %v717, %v931
        %v933 = vmul.f32 %v921, 3.8918573e-05
        %v934 = vadd.f32 %v933, 0.001143296
        %v935 = vmul.f32 %v921, %v934
        %v936 = vadd.f32 %v935, 0.014752088
        %v937 = vmul.f32 %v921, %v936
        %v938 = vadd.f32 %v937, 0.112945676
        %v939 = vmul.f32 %v921, %v938
        %v940 = vadd.f32 %v939, 0.4994258
        %v941 = vmul.f32 %v921, %v940
        %v942 = vadd.f32 %v941, 1.0
        %v943 = vrcp.pop %v942
        %v944 = vmul.f32 %v942, %v943
        %v945 = vsub.f32 1.0, %v944
        %v946 = vmul.f32 %v943, %v945
        %v947 = vadd.f32 %v943, %v946
        %vm948 = vweird.f32 %v942
        %vm949 = vweird.f32 %v943
        %vm950 = vmor %vm948, %vm949
        %v951 = vsel %vm950, %v943, %v947
        %v952 = vand.u32 2147483647, %v942
        %vm953 = vcmp.eq.f32.partialorder %v952, 8.507059e+37
        %v954 = vand.u32 %v942, 2147483648
        %v955 = vor.u32 1.1754944e-38, %v954
        %v956 = vsel %vm953, %v955, %v951
        %v957 = vmul.f32 %v932, %v956
        %v958 = vmin.f32 %v957, 1.0
        %v959 = vmax.f32 %v958, -1.0
        %v960 = vmul.f32 %v718, %v718
        %v961 = vmin.f32 16.0, %v960
        %v962 = vmul.f32 %v961, 2.1237322e-06
        %v963 = vadd.f32 %v962, 0.00028619796
        %v964 = vmul.f32 %v961, %v963
        %v965 = vadd.f32 %v964, 0.0036580483
        %v966 = vmul.f32 %v961, %v965
        %v967 = vadd.f32 %v966, 0.05243302
        %v968 = vmul.f32 %v961, %v967
        %v969 = vadd.f32 %v968, 0.18741608
        %v970 = vmul.f32 %v961, %v969
        %v971 = vadd.f32 %v970, 1.1283791
        %v972 = vmul.f32 %v718, %v971
        %v973 = vmul.f32 %v961, 3.8918573e-05
        %v974 = vadd.f32 %v973, 0.001143296
        %v975 = vmul.f32 %v961, %v974
        %v976 = vadd.f32 %v975, 0.014752088
        %v977 = vmul.f32 %v961, %v976
        %v978 = vadd.f32 %v977, 0.112945676
        %v979 = vmul.f32 %v961, %v978
        %v980 = vadd.f32 %v979, 0.4994258
        %v981 = vmul.f32 %v961, %v980
        %v982 = vadd.f32 %v981, 1.0
        %v983 = vrcp.pop %v982
        %v984 = vmul.f32 %v982, %v983
        %v985 = vsub.f32 1.0, %v984
        %v986 = vmul.f32 %v983, %v985
        %v987 = vadd.f32 %v983, %v986
        %vm988 = vweird.f32 %v982
        %vm989 = vweird.f32 %v983
        %vm990 = vmor %vm988, %vm989
        %v991 = vsel %vm990, %v983, %v987
        %v992 = vand.u32 2147483647, %v982
        %vm993 = vcmp.eq.f32.partialorder %v992, 8.507059e+37
        %v994 = vand.u32 %v982, 2147483648
        %v995 = vor.u32 1.1754944e-38, %v994
        %v996 = vsel %vm993, %v995, %v991
        %v997 = vmul.f32 %v972, %v996
        %v998 = vmin.f32 %v997, 1.0
        %v999 = vmax.f32 %v998, -1.0
        %v1000 = vmul.f32 %v719, %v719
        %v1001 = vmin.f32 16.0, %v1000
        %v1002 = vmul.f32 %v1001, 2.1237322e-06
        %v1003 = vadd.f32 %v1002, 0.00028619796
        %v1004 = vmul.f32 %v1001, %v1003
        %v1005 = vadd.f32 %v1004, 0.0036580483
        %v1006 = vmul.f32 %v1001, %v1005
        %v1007 = vadd.f32 %v1006, 0.05243302
        %v1008 = vmul.f32 %v1001, %v1007
        %v1009 = vadd.f32 %v1008, 0.18741608
        %v1010 = vmul.f32 %v1001, %v1009
        %v1011 = vadd.f32 %v1010, 1.1283791
        %v1012 = vmul.f32 %v719, %v1011
        %v1013 = vmul.f32 %v1001, 3.8918573e-05
        %v1014 = vadd.f32 %v1013, 0.001143296
        %v1015 = vmul.f32 %v1001, %v1014
        %v1016 = vadd.f32 %v1015, 0.014752088
        %v1017 = vmul.f32 %v1001, %v1016
        %v1018 = vadd.f32 %v1017, 0.112945676
        %v1019 = vmul.f32 %v1001, %v1018
        %v1020 = vadd.f32 %v1019, 0.4994258
        %v1021 = vmul.f32 %v1001, %v1020
        %v1022 = vadd.f32 %v1021, 1.0
        %v1023 = vrcp.pop %v1022
        %v1024 = vmul.f32 %v1022, %v1023
        %v1025 = vsub.f32 1.0, %v1024
        %v1026 = vmul.f32 %v1023, %v1025
        %v1027 = vadd.f32 %v1023, %v1026
        %vm1028 = vweird.f32 %v1022
        %vm1029 = vweird.f32 %v1023
        %vm1030 = vmor %vm1028, %vm1029
        %v1031 = vsel %vm1030, %v1023, %v1027
        %v1032 = vand.u32 2147483647, %v1022
        %vm1033 = vcmp.eq.f32.partialorder %v1032, 8.507059e+37
        %v1034 = vand.u32 %v1022, 2147483648
        %v1035 = vor.u32 1.1754944e-38, %v1034
        %v1036 = vsel %vm1033, %v1035, %v1031
        %v1037 = vmul.f32 %v1012, %v1036
        %v1038 = vmin.f32 %v1037, 1.0
        %v1039 = vmax.f32 %v1038, -1.0
        %v1040 = vadd.f32 %v759, 1.0
        %v1041 = vadd.f32 %v799, 1.0
        %v1042 = vadd.f32 %v839, 1.0
        %v1043 = vadd.f32 %v879, 1.0
        %v1044 = vadd.f32 %v919, 1.0
        %v1045 = vadd.f32 %v959, 1.0
        %v1046 = vadd.f32 %v999, 1.0
        %v1047 = vadd.f32 %v1039, 1.0
        %v1048 = vmul.f32 %v704, %v1040
        %v1049 = vmul.f32 %v705, %v1041
        %v1050 = vmul.f32 %v706, %v1042
        %v1051 = vmul.f32 %v707, %v1043
        %v1052 = vmul.f32 %v708, %v1044
        %v1053 = vmul.f32 %v709, %v1045
        %v1054 = vmul.f32 %v710, %v1046
        %v1055 = vmul.f32 %v711, %v1047
        %v1056 = vld [vmem:[%s3] sm:$0x3]
        %v1057 = vld [vmem:[#allocation8] sm:$0x3]
        %v1058 = vadd.f32 %v1048, %v1049
        %1059 = vadd.xlane.f32.xlu0 %v1058
        %v1060 = vpop.xlane.xlu0 %1059
        %v1061 = vadd.f32 %v1050, %v1051
        %1062 = vadd.xlane.f32.xlu0 %v1061
        %v1063 = vpop.xlane.xlu0 %1062
        %v1064 = vadd.f32 %v1052, %v1053
        %1065 = vadd.xlane.f32.xlu0 %v1064
        %v1066 = vpop.xlane.xlu0 %1065
        %v1067 = vadd.f32 %v1054, %v1055
        %1068 = vadd.xlane.f32.xlu0 %v1067
        %v1069 = vpop.xlane.xlu0 %1068
        %v1070 = vrcp.pop 256.0
        %v1071 = vmul.f32 256.0, %v1070
        %v1072 = vsub.f32 1.0, %v1071
        %v1073 = vmul.f32 %v1070, %v1072
        %v1074 = vadd.f32 %v1070, %v1073
        %vm1075 = vweird.f32 %v1070
        %v1076 = vsel %vm1075, %v1070, %v1074
        %v1077 = vmul.f32 %v1060, %v1076
        %v1078 = vmul.f32 %v1063, %v1076
        %v1079 = vmul.f32 %v1066, %v1076
        %v1080 = vmul.f32 %v1069, %v1076
        %v1081 = vsub.f32 %v1048, %v1077
        %v1082 = vsub.f32 %v1049, %v1077
        %v1083 = vsub.f32 %v1050, %v1078
        %v1084 = vsub.f32 %v1051, %v1078
        %v1085 = vsub.f32 %v1052, %v1079
        %v1086 = vsub.f32 %v1053, %v1079
        %v1087 = vsub.f32 %v1054, %v1080
        %v1088 = vsub.f32 %v1055, %v1080
        %v1089 = vmul.f32 %v1081, %v1081
        %v1090 = vmul.f32 %v1082, %v1082
        %v1091 = vmul.f32 %v1083, %v1083
        %v1092 = vmul.f32 %v1084, %v1084
        %v1093 = vmul.f32 %v1085, %v1085
        %v1094 = vmul.f32 %v1086, %v1086
        %v1095 = vmul.f32 %v1087, %v1087
        %v1096 = vmul.f32 %v1088, %v1088
        %v1097 = vadd.f32 %v1089, %v1090
        %1098 = vadd.xlane.f32.xlu0 %v1097
        %v1099 = vpop.xlane.xlu0 %1098
        %v1100 = vadd.f32 %v1091, %v1092
        %1101 = vadd.xlane.f32.xlu0 %v1100
        %v1102 = vpop.xlane.xlu0 %1101
        %v1103 = vadd.f32 %v1093, %v1094
        %1104 = vadd.xlane.f32.xlu0 %v1103
        %v1105 = vpop.xlane.xlu0 %1104
        %v1106 = vadd.f32 %v1095, %v1096
        %1107 = vadd.xlane.f32.xlu0 %v1106
        %v1108 = vpop.xlane.xlu0 %1107
        %v1109 = vmul.f32 %v1099, %v1076
        %v1110 = vmul.f32 %v1102, %v1076
        %v1111 = vmul.f32 %v1105, %v1076
        %v1112 = vmul.f32 %v1108, %v1076
        %v1113 = vadd.f32 %v1109, 1e-05
        %v1114 = vadd.f32 %v1110, 1e-05
        %v1115 = vadd.f32 %v1111, 1e-05
        %v1116 = vadd.f32 %v1112, 1e-05
        %v1117 = vrsqrt.pop %v1113
        %v1118 = vmul.f32 %v1117, %v1113
        %v1119 = vmul.f32 %v1118, %v1117
        %v1120 = vmul.f32 0.5, %v1119
        %v1121 = vsub.f32 1.5, %v1120
        %v1122 = vmul.f32 %v1117, %v1121
        %vm1123 = vweird.f32 %v1113
        %vm1124 = vweird.f32 %v1117
        %vm1125 = vmor %vm1123, %vm1124
        %v1126 = vsel %vm1125, %v1117, %v1122
        %v1127 = vrsqrt.pop %v1114
        %v1128 = vmul.f32 %v1127, %v1114
        %v1129 = vmul.f32 %v1128, %v1127
        %v1130 = vmul.f32 0.5, %v1129
        %v1131 = vsub.f32 1.5, %v1130
        %v1132 = vmul.f32 %v1127, %v1131
        %vm1133 = vweird.f32 %v1114
        %vm1134 = vweird.f32 %v1127
        %vm1135 = vmor %vm1133, %vm1134
        %v1136 = vsel %vm1135, %v1127, %v1132
        %v1137 = vrsqrt.pop %v1115
        %v1138 = vmul.f32 %v1137, %v1115
        %v1139 = vmul.f32 %v1138, %v1137
        %v1140 = vmul.f32 0.5, %v1139
        %v1141 = vsub.f32 1.5, %v1140
        %v1142 = vmul.f32 %v1137, %v1141
        %vm1143 = vweird.f32 %v1115
        %vm1144 = vweird.f32 %v1137
        %vm1145 = vmor %vm1143, %vm1144
        %v1146 = vsel %vm1145, %v1137, %v1142
        %v1147 = vrsqrt.pop %v1116
        %v1148 = vmul.f32 %v1147, %v1116
        %v1149 = vmul.f32 %v1148, %v1147
        %v1150 = vmul.f32 0.5, %v1149
        %v1151 = vsub.f32 1.5, %v1150
        %v1152 = vmul.f32 %v1147, %v1151
        %vm1153 = vweird.f32 %v1116
        %vm1154 = vweird.f32 %v1147
        %vm1155 = vmor %vm1153, %vm1154
        %v1156 = vsel %vm1155, %v1147, %v1152
        %v1157 = vmul.f32 %v1081, %v1126
        %v1158 = vmul.f32 %v1082, %v1126
        %v1159 = vmul.f32 %v1083, %v1136
        %v1160 = vmul.f32 %v1084, %v1136
        %v1161 = vmul.f32 %v1085, %v1146
        %v1162 = vmul.f32 %v1086, %v1146
        %v1163 = vmul.f32 %v1087, %v1156
        %v1164 = vmul.f32 %v1088, %v1156
        %v1166 = vperm.slane %v1056, 0
        %v1167 = vperm.slane %v1056, 1
        %v1170 = vmul.f32 %v1157, %v1166
        %v1171 = vmul.f32 %v1158, %v1167
        %v1172 = vmul.f32 %v1159, %v1166
        %v1173 = vmul.f32 %v1160, %v1167
        %v1174 = vmul.f32 %v1161, %v1166
        %v1175 = vmul.f32 %v1162, %v1167
        %v1176 = vmul.f32 %v1163, %v1166
        %v1177 = vmul.f32 %v1164, %v1167
        %v1179 = vperm.slane %v1057, 0
        %v1180 = vperm.slane %v1057, 1
        %v1183 = vadd.f32 %v1170, %v1179
        %v1184 = vadd.f32 %v1171, %v1180
        %v1185 = vadd.f32 %v1172, %v1179
        %v1186 = vadd.f32 %v1173, %v1180
        %v1187 = vadd.f32 %v1174, %v1179
        %v1188 = vadd.f32 %v1175, %v1180
        %v1189 = vadd.f32 %v1176, %v1179
        %v1190 = vadd.f32 %v1177, %v1180
        %v1191 = vpack.c.bf16 %v1185, %v1183
        %v1192 = vpack.c.bf16 %v1186, %v1184
        %v1193 = vpack.c.bf16 %v1189, %v1187
        %v1194 = vpack.c.bf16 %v1190, %v1188
        %v1195 = vld [vmem:[#allocation10] sm:$0xf]
        %v1196 = vld [vmem:[#allocation10 + $0x4] sm:$0xf]
        %v1197 = vld [vmem:[#allocation10 + $0x8] sm:$0xf]
        %v1198 = vld [vmem:[#allocation10 + $0xc] sm:$0xf]
        %v1199 = vld [vmem:[#allocation10 + $0x10] sm:$0xf]
        %v1200 = vld [vmem:[#allocation10 + $0x14] sm:$0xf]
        %v1201 = vld [vmem:[#allocation10 + $0x18] sm:$0xf]
        %v1202 = vld [vmem:[#allocation10 + $0x1c] sm:$0xf]
        %v1203 = vld [vmem:[#allocation10 + $0x20] sm:$0xf]
        %v1204 = vld [vmem:[#allocation10 + $0x24] sm:$0xf]
        %v1205 = vld [vmem:[#allocation10 + $0x28] sm:$0xf]
        %v1206 = vld [vmem:[#allocation10 + $0x2c] sm:$0xf]
        %v1207 = vld [vmem:[#allocation10 + $0x30] sm:$0xf]
        %v1208 = vld [vmem:[#allocation10 + $0x34] sm:$0xf]
        %v1209 = vld [vmem:[#allocation10 + $0x38] sm:$0xf]
        %v1210 = vld [vmem:[#allocation10 + $0x3c] sm:$0xf]
        %v1211 = vld [vmem:[#allocation10 + $0x40] sm:$0xf]
        %v1212 = vld [vmem:[#allocation10 + $0x44] sm:$0xf]
        %v1213 = vld [vmem:[#allocation10 + $0x48] sm:$0xf]
        %v1214 = vld [vmem:[#allocation10 + $0x4c] sm:$0xf]
        %v1215 = vld [vmem:[#allocation10 + $0x50] sm:$0xf]
        %v1216 = vld [vmem:[#allocation10 + $0x54] sm:$0xf]
        %v1217 = vld [vmem:[#allocation10 + $0x58] sm:$0xf]
        %v1218 = vld [vmem:[#allocation10 + $0x5c] sm:$0xf]
        %v1219 = vld [vmem:[#allocation10 + $0x60] sm:$0xf]
        %v1220 = vld [vmem:[#allocation10 + $0x64] sm:$0xf]
        %v1221 = vld [vmem:[#allocation10 + $0x68] sm:$0xf]
        %v1222 = vld [vmem:[#allocation10 + $0x6c] sm:$0xf]
        %v1223 = vld [vmem:[#allocation10 + $0x70] sm:$0xf]
        %v1224 = vld [vmem:[#allocation10 + $0x74] sm:$0xf]
        %v1225 = vld [vmem:[#allocation10 + $0x78] sm:$0xf]
        %v1226 = vld [vmem:[#allocation10 + $0x7c] sm:$0xf]
        %v1227 = vld [vmem:[%s6] sm:$0x1]
        %v1229 = vperm.slane %v1227, 0
        %v1263 = vunpack.c.l.b16 %v1195
        %v1264 = vunpack.c.l.b16 %v1196
        %v1265 = vunpack.c.l.b16 %v1197
        %v1266 = vunpack.c.l.b16 %v1198
        %v1267 = vunpack.c.l.b16 %v1199
        %v1268 = vunpack.c.l.b16 %v1200
        %v1269 = vunpack.c.l.b16 %v1201
        %v1270 = vunpack.c.l.b16 %v1202
        %v1271 = vunpack.c.l.b16 %v1203
        %v1272 = vunpack.c.l.b16 %v1204
        %v1273 = vunpack.c.l.b16 %v1205
        %v1274 = vunpack.c.l.b16 %v1206
        %v1275 = vunpack.c.l.b16 %v1207
        %v1276 = vunpack.c.l.b16 %v1208
        %v1277 = vunpack.c.l.b16 %v1209
        %v1278 = vunpack.c.l.b16 %v1210
        %v1279 = vunpack.c.l.b16 %v1211
        %v1280 = vunpack.c.l.b16 %v1212
        %v1281 = vunpack.c.l.b16 %v1213
        %v1282 = vunpack.c.l.b16 %v1214
        %v1283 = vunpack.c.l.b16 %v1215
        %v1284 = vunpack.c.l.b16 %v1216
        %v1285 = vunpack.c.l.b16 %v1217
        %v1286 = vunpack.c.l.b16 %v1218
        %v1287 = vunpack.c.l.b16 %v1219
        %v1288 = vunpack.c.l.b16 %v1220
        %v1289 = vunpack.c.l.b16 %v1221
        %v1290 = vunpack.c.l.b16 %v1222
        %v1291 = vunpack.c.l.b16 %v1223
        %v1292 = vunpack.c.l.b16 %v1224
        %v1293 = vunpack.c.l.b16 %v1225
        %v1294 = vunpack.c.l.b16 %v1226
        %v1295 = vpack.c.b16 %v1264, %v1263
        %v1296 = vpack.c.b16 %v1266, %v1265
        %v1297 = vpack.c.b16 %v1268, %v1267
        %v1298 = vpack.c.b16 %v1270, %v1269
        %v1299 = vpack.c.b16 %v1272, %v1271
        %v1300 = vpack.c.b16 %v1274, %v1273
        %v1301 = vpack.c.b16 %v1276, %v1275
        %v1302 = vpack.c.b16 %v1278, %v1277
        %v1303 = vpack.c.b16 %v1280, %v1279
        %v1304 = vpack.c.b16 %v1282, %v1281
        %v1305 = vpack.c.b16 %v1284, %v1283
        %v1306 = vpack.c.b16 %v1286, %v1285
        %v1307 = vpack.c.b16 %v1288, %v1287
        %v1308 = vpack.c.b16 %v1290, %v1289
        %v1309 = vpack.c.b16 %v1292, %v1291
        %v1310 = vpack.c.b16 %v1294, %v1293
        %1327 = vmatpush.bf16.msra.mxu0 %v1302
        %1328 = vmatpush.bf16.msra.mxu0 %v1301
        %1329 = vmatpush.bf16.msra.mxu0 %v1300
        %1330 = vmatpush.bf16.msra.mxu0 %v1299
        %1331 = vmatpush.bf16.msra.mxu0 %v1298
        %1332 = vmatpush.bf16.msra.mxu0 %v1297
        %1333 = vmatpush.bf16.msra.mxu0 %v1296
        %1334 = vmatpush.bf16.msra.mxu0 %v1295
        %1335 = vmatmul.bf16.gmra.mxu0 %v1191
        %v1336 = vpop.f32.mrf.mxu0
        %v1337 = vadd.f32 %v1229, %v1336
        %v1338 = vpop.f32.mrf.mxu0
        %v1339 = vadd.f32 %v1229, %v1338
        %1340 = vmatmul.bf16.gmra.mxu0 %v1193
        %v1341 = vpop.f32.mrf.mxu0
        %v1342 = vadd.f32 %v1229, %v1341
        %v1343 = vpop.f32.mrf.mxu0
        %v1344 = vadd.f32 %v1229, %v1343
        %1345 = vdwg.mxu0
        %1346 = vmatpush.bf16.msra.mxu0 %v1310
        %1347 = vmatpush.bf16.msra.mxu0 %v1309
        %1348 = vmatpush.bf16.msra.mxu0 %v1308
        %1349 = vmatpush.bf16.msra.mxu0 %v1307
        %1350 = vmatpush.bf16.msra.mxu0 %v1306
        %1351 = vmatpush.bf16.msra.mxu0 %v1305
        %1352 = vmatpush.bf16.msra.mxu0 %v1304
        %1353 = vmatpush.bf16.msra.mxu0 %v1303
        %1354 = vmatmul.bf16.gmra.mxu0 %v1192
        %v1355 = vpop.f32.mrf.mxu0
        %v1356 = vadd.f32 %v1337, %v1355
        %v1357 = vpop.f32.mrf.mxu0
        %v1358 = vadd.f32 %v1339, %v1357
        %1359 = vmatmul.bf16.gmra.mxu0 %v1194
        %v1360 = vpop.f32.mrf.mxu0
        %v1361 = vadd.f32 %v1342, %v1360
        %v1362 = vpop.f32.mrf.mxu0
        %v1363 = vadd.f32 %v1344, %v1362
        %1364 = vdwg.mxu0
        %v1365 = vmul.f32 %v1356, 0.5
        %v1366 = vmul.f32 %v1358, 0.5
        %v1367 = vmul.f32 %v1361, 0.5
        %v1368 = vmul.f32 %v1363, 0.5
        %v1369 = vmul.f32 %v1356, 0.70710677
        %v1370 = vmul.f32 %v1358, 0.70710677
        %v1371 = vmul.f32 %v1361, 0.70710677
        %v1372 = vmul.f32 %v1363, 0.70710677
        %v1373 = vmul.f32 %v1369, %v1369
        %v1374 = vmin.f32 16.0, %v1373
        %v1375 = vmul.f32 %v1374, 2.1237322e-06
        %v1376 = vadd.f32 %v1375, 0.00028619796
        %v1377 = vmul.f32 %v1374, %v1376
        %v1378 = vadd.f32 %v1377, 0.0036580483
        %v1379 = vmul.f32 %v1374, %v1378
        %v1380 = vadd.f32 %v1379, 0.05243302
        %v1381 = vmul.f32 %v1374, %v1380
        %v1382 = vadd.f32 %v1381, 0.18741608
        %v1383 = vmul.f32 %v1374, %v1382
        %v1384 = vadd.f32 %v1383, 1.1283791
        %v1385 = vmul.f32 %v1369, %v1384
        %v1386 = vmul.f32 %v1374, 3.8918573e-05
        %v1387 = vadd.f32 %v1386, 0.001143296
        %v1388 = vmul.f32 %v1374, %v1387
        %v1389 = vadd.f32 %v1388, 0.014752088
        %v1390 = vmul.f32 %v1374, %v1389
        %v1391 = vadd.f32 %v1390, 0.112945676
        %v1392 = vmul.f32 %v1374, %v1391
        %v1393 = vadd.f32 %v1392, 0.4994258
        %v1394 = vmul.f32 %v1374, %v1393
        %v1395 = vadd.f32 %v1394, 1.0
        %v1396 = vrcp.pop %v1395
        %v1397 = vmul.f32 %v1395, %v1396
        %v1398 = vsub.f32 1.0, %v1397
        %v1399 = vmul.f32 %v1396, %v1398
        %v1400 = vadd.f32 %v1396, %v1399
        %vm1401 = vweird.f32 %v1395
        %vm1402 = vweird.f32 %v1396
        %vm1403 = vmor %vm1401, %vm1402
        %v1404 = vsel %vm1403, %v1396, %v1400
        %v1405 = vand.u32 2147483647, %v1395
        %vm1406 = vcmp.eq.f32.partialorder %v1405, 8.507059e+37
        %v1407 = vand.u32 %v1395, 2147483648
        %v1408 = vor.u32 1.1754944e-38, %v1407
        %v1409 = vsel %vm1406, %v1408, %v1404
        %v1410 = vmul.f32 %v1385, %v1409
        %v1411 = vmin.f32 %v1410, 1.0
        %v1412 = vmax.f32 %v1411, -1.0
        %v1413 = vmul.f32 %v1370, %v1370
        %v1414 = vmin.f32 16.0, %v1413
        %v1415 = vmul.f32 %v1414, 2.1237322e-06
        %v1416 = vadd.f32 %v1415, 0.00028619796
        %v1417 = vmul.f32 %v1414, %v1416
        %v1418 = vadd.f32 %v1417, 0.0036580483
        %v1419 = vmul.f32 %v1414, %v1418
        %v1420 = vadd.f32 %v1419, 0.05243302
        %v1421 = vmul.f32 %v1414, %v1420
        %v1422 = vadd.f32 %v1421, 0.18741608
        %v1423 = vmul.f32 %v1414, %v1422
        %v1424 = vadd.f32 %v1423, 1.1283791
        %v1425 = vmul.f32 %v1370, %v1424
        %v1426 = vmul.f32 %v1414, 3.8918573e-05
        %v1427 = vadd.f32 %v1426, 0.001143296
        %v1428 = vmul.f32 %v1414, %v1427
        %v1429 = vadd.f32 %v1428, 0.014752088
        %v1430 = vmul.f32 %v1414, %v1429
        %v1431 = vadd.f32 %v1430, 0.112945676
        %v1432 = vmul.f32 %v1414, %v1431
        %v1433 = vadd.f32 %v1432, 0.4994258
        %v1434 = vmul.f32 %v1414, %v1433
        %v1435 = vadd.f32 %v1434, 1.0
        %v1436 = vrcp.pop %v1435
        %v1437 = vmul.f32 %v1435, %v1436
        %v1438 = vsub.f32 1.0, %v1437
        %v1439 = vmul.f32 %v1436, %v1438
        %v1440 = vadd.f32 %v1436, %v1439
        %vm1441 = vweird.f32 %v1435
        %vm1442 = vweird.f32 %v1436
        %vm1443 = vmor %vm1441, %vm1442
        %v1444 = vsel %vm1443, %v1436, %v1440
        %v1445 = vand.u32 2147483647, %v1435
        %vm1446 = vcmp.eq.f32.partialorder %v1445, 8.507059e+37
        %v1447 = vand.u32 %v1435, 2147483648
        %v1448 = vor.u32 1.1754944e-38, %v1447
        %v1449 = vsel %vm1446, %v1448, %v1444
        %v1450 = vmul.f32 %v1425, %v1449
        %v1451 = vmin.f32 %v1450, 1.0
        %v1452 = vmax.f32 %v1451, -1.0
        %v1453 = vmul.f32 %v1371, %v1371
        %v1454 = vmin.f32 16.0, %v1453
        %v1455 = vmul.f32 %v1454, 2.1237322e-06
        %v1456 = vadd.f32 %v1455, 0.00028619796
        %v1457 = vmul.f32 %v1454, %v1456
        %v1458 = vadd.f32 %v1457, 0.0036580483
        %v1459 = vmul.f32 %v1454, %v1458
        %v1460 = vadd.f32 %v1459, 0.05243302
        %v1461 = vmul.f32 %v1454, %v1460
        %v1462 = vadd.f32 %v1461, 0.18741608
        %v1463 = vmul.f32 %v1454, %v1462
        %v1464 = vadd.f32 %v1463, 1.1283791
        %v1465 = vmul.f32 %v1371, %v1464
        %v1466 = vmul.f32 %v1454, 3.8918573e-05
        %v1467 = vadd.f32 %v1466, 0.001143296
        %v1468 = vmul.f32 %v1454, %v1467
        %v1469 = vadd.f32 %v1468, 0.014752088
        %v1470 = vmul.f32 %v1454, %v1469
        %v1471 = vadd.f32 %v1470, 0.112945676
        %v1472 = vmul.f32 %v1454, %v1471
        %v1473 = vadd.f32 %v1472, 0.4994258
        %v1474 = vmul.f32 %v1454, %v1473
        %v1475 = vadd.f32 %v1474, 1.0
        %v1476 = vrcp.pop %v1475
        %v1477 = vmul.f32 %v1475, %v1476
        %v1478 = vsub.f32 1.0, %v1477
        %v1479 = vmul.f32 %v1476, %v1478
        %v1480 = vadd.f32 %v1476, %v1479
        %vm1481 = vweird.f32 %v1475
        %vm1482 = vweird.f32 %v1476
        %vm1483 = vmor %vm1481, %vm1482
        %v1484 = vsel %vm1483, %v1476, %v1480
        %v1485 = vand.u32 2147483647, %v1475
        %vm1486 = vcmp.eq.f32.partialorder %v1485, 8.507059e+37
        %v1487 = vand.u32 %v1475, 2147483648
        %v1488 = vor.u32 1.1754944e-38, %v1487
        %v1489 = vsel %vm1486, %v1488, %v1484
        %v1490 = vmul.f32 %v1465, %v1489
        %v1491 = vmin.f32 %v1490, 1.0
        %v1492 = vmax.f32 %v1491, -1.0
        %v1493 = vmul.f32 %v1372, %v1372
        %v1494 = vmin.f32 16.0, %v1493
        %v1495 = vmul.f32 %v1494, 2.1237322e-06
        %v1496 = vadd.f32 %v1495, 0.00028619796
        %v1497 = vmul.f32 %v1494, %v1496
        %v1498 = vadd.f32 %v1497, 0.0036580483
        %v1499 = vmul.f32 %v1494, %v1498
        %v1500 = vadd.f32 %v1499, 0.05243302
        %v1501 = vmul.f32 %v1494, %v1500
        %v1502 = vadd.f32 %v1501, 0.18741608
        %v1503 = vmul.f32 %v1494, %v1502
        %v1504 = vadd.f32 %v1503, 1.1283791
        %v1505 = vmul.f32 %v1372, %v1504
        %v1506 = vmul.f32 %v1494, 3.8918573e-05
        %v1507 = vadd.f32 %v1506, 0.001143296
        %v1508 = vmul.f32 %v1494, %v1507
        %v1509 = vadd.f32 %v1508, 0.014752088
        %v1510 = vmul.f32 %v1494, %v1509
        %v1511 = vadd.f32 %v1510, 0.112945676
        %v1512 = vmul.f32 %v1494, %v1511
        %v1513 = vadd.f32 %v1512, 0.4994258
        %v1514 = vmul.f32 %v1494, %v1513
        %v1515 = vadd.f32 %v1514, 1.0
        %v1516 = vrcp.pop %v1515
        %v1517 = vmul.f32 %v1515, %v1516
        %v1518 = vsub.f32 1.0, %v1517
        %v1519 = vmul.f32 %v1516, %v1518
        %v1520 = vadd.f32 %v1516, %v1519
        %vm1521 = vweird.f32 %v1515
        %vm1522 = vweird.f32 %v1516
        %vm1523 = vmor %vm1521, %vm1522
        %v1524 = vsel %vm1523, %v1516, %v1520
        %v1525 = vand.u32 2147483647, %v1515
        %vm1526 = vcmp.eq.f32.partialorder %v1525, 8.507059e+37
        %v1527 = vand.u32 %v1515, 2147483648
        %v1528 = vor.u32 1.1754944e-38, %v1527
        %v1529 = vsel %vm1526, %v1528, %v1524
        %v1530 = vmul.f32 %v1505, %v1529
        %v1531 = vmin.f32 %v1530, 1.0
        %v1532 = vmax.f32 %v1531, -1.0
        %v1533 = vadd.f32 %v1412, 1.0
        %v1534 = vadd.f32 %v1452, 1.0
        %v1535 = vadd.f32 %v1492, 1.0
        %v1536 = vadd.f32 %v1532, 1.0
        %v1537 = vmul.f32 %v1365, %v1533
        %v1538 = vmul.f32 %v1366, %v1534
        %v1539 = vmul.f32 %v1367, %v1535
        %v1540 = vmul.f32 %v1368, %v1536
        %v1541 = vld [vmem:[%s7] sm:$0x1]
        %v1542 = vld [vmem:[%s8] sm:$0x1]
        %1543 = vadd.xlane.f32.xlu0 %v1537
        %v1544 = vpop.xlane.xlu0 %1543
        %1545 = vadd.xlane.f32.xlu0 %v1538
        %v1546 = vpop.xlane.xlu0 %1545
        %1547 = vadd.xlane.f32.xlu0 %v1539
        %v1548 = vpop.xlane.xlu0 %1547
        %1549 = vadd.xlane.f32.xlu0 %v1540
        %v1550 = vpop.xlane.xlu0 %1549
        %v1551 = vrcp.pop 128.0
        %v1552 = vmul.f32 128.0, %v1551
        %v1553 = vsub.f32 1.0, %v1552
        %v1554 = vmul.f32 %v1551, %v1553
        %v1555 = vadd.f32 %v1551, %v1554
        %vm1556 = vweird.f32 %v1551
        %v1557 = vsel %vm1556, %v1551, %v1555
        %v1558 = vmul.f32 %v1544, %v1557
        %v1559 = vmul.f32 %v1546, %v1557
        %v1560 = vmul.f32 %v1548, %v1557
        %v1561 = vmul.f32 %v1550, %v1557
        %v1562 = vsub.f32 %v1537, %v1558
        %v1563 = vsub.f32 %v1538, %v1559
        %v1564 = vsub.f32 %v1539, %v1560
        %v1565 = vsub.f32 %v1540, %v1561
        %v1566 = vmul.f32 %v1562, %v1562
        %v1567 = vmul.f32 %v1563, %v1563
        %v1568 = vmul.f32 %v1564, %v1564
        %v1569 = vmul.f32 %v1565, %v1565
        %1570 = vadd.xlane.f32.xlu0 %v1566
        %v1571 = vpop.xlane.xlu0 %1570
        %1572 = vadd.xlane.f32.xlu0 %v1567
        %v1573 = vpop.xlane.xlu0 %1572
        %1574 = vadd.xlane.f32.xlu0 %v1568
        %v1575 = vpop.xlane.xlu0 %1574
        %1576 = vadd.xlane.f32.xlu0 %v1569
        %v1577 = vpop.xlane.xlu0 %1576
        %v1578 = vmul.f32 %v1571, %v1557
        %v1579 = vmul.f32 %v1573, %v1557
        %v1580 = vmul.f32 %v1575, %v1557
        %v1581 = vmul.f32 %v1577, %v1557
        %v1582 = vadd.f32 %v1578, 1e-05
        %v1583 = vadd.f32 %v1579, 1e-05
        %v1584 = vadd.f32 %v1580, 1e-05
        %v1585 = vadd.f32 %v1581, 1e-05
        %v1586 = vrsqrt.pop %v1582
        %v1587 = vmul.f32 %v1586, %v1582
        %v1588 = vmul.f32 %v1587, %v1586
        %v1589 = vmul.f32 0.5, %v1588
        %v1590 = vsub.f32 1.5, %v1589
        %v1591 = vmul.f32 %v1586, %v1590
        %vm1592 = vweird.f32 %v1582
        %vm1593 = vweird.f32 %v1586
        %vm1594 = vmor %vm1592, %vm1593
        %v1595 = vsel %vm1594, %v1586, %v1591
        %v1596 = vrsqrt.pop %v1583
        %v1597 = vmul.f32 %v1596, %v1583
        %v1598 = vmul.f32 %v1597, %v1596
        %v1599 = vmul.f32 0.5, %v1598
        %v1600 = vsub.f32 1.5, %v1599
        %v1601 = vmul.f32 %v1596, %v1600
        %vm1602 = vweird.f32 %v1583
        %vm1603 = vweird.f32 %v1596
        %vm1604 = vmor %vm1602, %vm1603
        %v1605 = vsel %vm1604, %v1596, %v1601
        %v1606 = vrsqrt.pop %v1584
        %v1607 = vmul.f32 %v1606, %v1584
        %v1608 = vmul.f32 %v1607, %v1606
        %v1609 = vmul.f32 0.5, %v1608
        %v1610 = vsub.f32 1.5, %v1609
        %v1611 = vmul.f32 %v1606, %v1610
        %vm1612 = vweird.f32 %v1584
        %vm1613 = vweird.f32 %v1606
        %vm1614 = vmor %vm1612, %vm1613
        %v1615 = vsel %vm1614, %v1606, %v1611
        %v1616 = vrsqrt.pop %v1585
        %v1617 = vmul.f32 %v1616, %v1585
        %v1618 = vmul.f32 %v1617, %v1616
        %v1619 = vmul.f32 0.5, %v1618
        %v1620 = vsub.f32 1.5, %v1619
        %v1621 = vmul.f32 %v1616, %v1620
        %vm1622 = vweird.f32 %v1585
        %vm1623 = vweird.f32 %v1616
        %vm1624 = vmor %vm1622, %vm1623
        %v1625 = vsel %vm1624, %v1616, %v1621
        %v1626 = vmul.f32 %v1562, %v1595
        %v1627 = vmul.f32 %v1563, %v1605
        %v1628 = vmul.f32 %v1564, %v1615
        %v1629 = vmul.f32 %v1565, %v1625
        %v1631 = vperm.slane %v1541, 0
        %v1633 = vmul.f32 %v1626, %v1631
        %v1634 = vmul.f32 %v1627, %v1631
        %v1635 = vmul.f32 %v1628, %v1631
        %v1636 = vmul.f32 %v1629, %v1631
        %v1638 = vperm.slane %v1542, 0
        %v1640 = vadd.f32 %v1633, %v1638
        %v1641 = vadd.f32 %v1634, %v1638
        %v1642 = vadd.f32 %v1635, %v1638
        %v1643 = vadd.f32 %v1636, %v1638
        %1644 = vst [vmem:[%s415] sm:$0xff] %v1640
        %1645 = vst [vmem:[%s415 + $0x8] sm:$0xff] %v1641
        %1646 = vst [vmem:[%s415 + $0x10] sm:$0xff] %v1642
        %1647 = vst [vmem:[%s415 + $0x18] sm:$0xff] %v1643
        %s1648 = sand.u32 %s230, 1
        %s1649 = scalar_lea.sflag [#allocation4], %s1648
        %s1650 = sand.u32 %s230, 1
        %s1651 = smul.addr %s1650, 32
        %s1652 = scalar_lea.vmem [#allocation11], %s1651
        // Predicated region
        $region77: #{tpu_custom_call.1} parent=55 // pred_check
          %p1653 = pneg %p240
        $region78: #{tpu_custom_call.1} parent=55 // pred_check_branch
          %1655 = sbr.rel (%p1653) target = $region80
        $region79: #{tpu_custom_call.1} parent=55 // pred_region
          %s1656 = smul.u32 4, %s28
          %1658 = vsyncadd %s1649, 0
          %s1659 = smul.addr %s1656, 8
          %s1660 = scalar_lea.hbm %s9, %s1659
          %s1661 = sshll.u32 %s1652, 4
          %s1662 = int_to_ptr.vmem [resolvable:$true] %s1661
          %s1663 = sshll.u32 %s1660, 4
          %s1664 = int_to_ptr.hbm [resolvable:$true] %s1663
          %1669 = dma.vmem_to_hbm [thread:$0]  %s1662, 512, %s1664, %s1649, 128, 128, 8
        $region80: #{tpu_custom_call.1} parent=55 // pred_fallthru
          _
      $region56: #{tpu_custom_call.1} parent=5 // pred_fallthru
        _
      %p1670 = scmp.le.s32.totalorder 2, %s23
      // Predicated region
      $region81: #{tpu_custom_call.1} parent=5 // pred_check
        %p1671 = pneg %p1670
      $region82: #{tpu_custom_call.1} parent=5 // pred_check_branch
        %1673 = sbr.rel (%p1671) target = $region84
      $region83: #{tpu_custom_call.1} parent=5 // pred_region
        %s1674 = ssub.s32 %s23, 2
        // Predicated region
        $region85: #{tpu_custom_call.1} parent=83 // pred_check
          %p1675 = pneg %p246
        $region86: #{tpu_custom_call.1} parent=83 // pred_check_branch
          %1677 = sbr.rel (%p1675) target = $region88
        $region87: #{tpu_custom_call.1} parent=83 // pred_region
          %s1678 = sand.u32 %s231, 1
          %s1679 = scalar_lea.sflag [#allocation4], %s1678
          %s1680 = sand.u32 %s231, 1
          %s1681 = smul.addr %s1680, 32
          %s1682 = scalar_lea.vmem [#allocation11], %s1681
          %1684 = dma.done %s1679, 512
        $region88: #{tpu_custom_call.1} parent=83 // pred_fallthru
          _
      $region84: #{tpu_custom_call.1} parent=5 // pred_fallthru
        _
    $region6: #{tpu_custom_call.1} parent=1 // loop_footer
      %s27 = sadd.s32 1, %s23
    $region7: #{tpu_custom_call.1} parent=1 // loop_footer_branch
      %22 = sbr.rel target = $region3
    $region8: #{tpu_custom_call.1} parent=1 // loop_exit
      _
    %1685 = vsyncpa [#allocation3], 1
    %s1686 = scalar_lea.sflag [#allocation3], 1
    %1687 = vsyncpa %s1686, 1
    %1688 = vsyncpa [#allocation6], 1
    %1689 = vsyncpa [#allocation9], 1
    %1690 = vsyncpa [#allocation4], 1
    %s1691 = scalar_lea.sflag [#allocation4], 1
    %1692 = vsyncpa %s1691, 1

</llo_original>
